<compile_context>
chip_gen: v7x
topology: tpu7x:2x2x1
jax: 0.10.0
libtpu: 0.0.40
codegen_flags: <defaults>
</compile_context>

<pallas_src>
import functools

import jax
import jax.numpy as jnp
from jax.experimental import pallas as pl
from jax.experimental.pallas import tpu as pltpu


def _round_up(n, m):
    return (n + m - 1) // m * m


def smpnn_kernel(h0_hbm, adj_hbm, gcnw_ref, w1_ref, w2_ref, vec_ref,
                 wro_ref, bro_ref, out_ref, h_ref, adj_ref, *, hidden_real):
    """One grid step == one (GNNLayer + FeedForward) layer.

    h_ref / adj_ref are persistent VMEM scratch (single-buffered by
    construction); per-layer weights arrive as streamed (double-buffered)
    blocks.
    """
    l = pl.program_id(0)
    num_layers = pl.num_programs(0)

    # ---- one-time residents: pre-projected features h0 and adjacency ----
    @pl.when(l == 0)
    def _():
        pltpu.sync_copy(h0_hbm, h_ref)
        pltpu.sync_copy(adj_hbm, adj_ref)

    h = h_ref[...]                                # f32 [N_pad, H_pad]
    vecs = vec_ref[0]                             # f32 [8, H_pad] packed vectors
    gcn_shift = vecs[0:1, :]                      # gcn_b * bn_scale + bn_shift
    u_bias = vecs[1:2, :]                         # ln_b @ W1

    # ---- GNNLayer: GCNConv -> BatchNorm(eval, folded) -> SiLU -> residual ----
    xw = jnp.dot(h.astype(jnp.bfloat16), gcnw_ref[0],
                 preferred_element_type=jnp.float32)
    g = jnp.dot(adj_ref[...], xw.astype(jnp.bfloat16),
                preferred_element_type=jnp.float32)
    g = g + gcn_shift
    g = g * jax.nn.sigmoid(g)                     # SiLU
    h = g + h                                     # residual

    # ---- FeedForward: LayerNorm (gamma folded into W1) -> W1 -> SiLU -> W2 -> residual ----
    h_pad = h.shape[-1]
    inv_h = 1.0 / hidden_real
    mu = jnp.sum(h, axis=-1, keepdims=True) * inv_h       # padded lanes of h are 0
    d = h - mu
    if hidden_real < h_pad:
        # Zero padded lanes so the two-pass variance only sees real channels.
        lane = jax.lax.broadcasted_iota(jnp.int32, (1, h_pad), 1)
        d = jnp.where(lane < hidden_real, d, 0.0)
    var = jnp.sum(d * d, axis=-1, keepdims=True) * inv_h   # two-pass (stable) form
    xn = d * jax.lax.rsqrt(var + 1e-5)
    u = jnp.dot(xn.astype(jnp.bfloat16), w1_ref[0],
                preferred_element_type=jnp.float32) + u_bias
    u = u * jax.nn.sigmoid(u)                     # SiLU
    v = jnp.dot(u.astype(jnp.bfloat16), w2_ref[0],
                preferred_element_type=jnp.float32)
    h = v + h                                     # residual
    h_ref[...] = h

    # ---- ReadoutHead (agg=False) at the last grid step ----
    @pl.when(l == num_layers - 1)
    def _():
        out = jnp.dot(h.astype(jnp.bfloat16), wro_ref[...],
                      preferred_element_type=jnp.float32) + bro_ref[...]
        out_ref[...] = out.astype(out_ref.dtype)


def build_gcn_adjacency(edge_index, num_nodes):
    """Dense D^{-1/2} (A + I) D^{-1/2}, matching PyG GCNConv's gcn_norm.

    Existing edges (including explicit self-loops, even duplicated ones) keep
    unit weight; a unit self-loop is added only for nodes that lack one
    (add_remaining_self_loops semantics).
    """
    src = edge_index[0]
    dst = edge_index[1]
    is_loop = (src == dst).astype(jnp.float32)
    has_loop = jnp.zeros((num_nodes,), jnp.float32).at[dst].max(is_loop)
    loops = jnp.arange(num_nodes, dtype=edge_index.dtype)
    src_all = jnp.concatenate([src, loops])
    dst_all = jnp.concatenate([dst, loops])
    w_all = jnp.concatenate([jnp.ones_like(src, dtype=jnp.float32),
                             1.0 - has_loop])
    deg = jnp.zeros((num_nodes,), jnp.float32).at[dst_all].add(w_all)
    dinv = jnp.where(deg > 0, jax.lax.rsqrt(deg), 0.0)
    vals = dinv[src_all] * w_all * dinv[dst_all]
    # out[dst] += norm * x[src]  =>  A[dst, src] = norm
    adj = jnp.zeros((num_nodes, num_nodes), jnp.float32).at[dst_all, src_all].add(vals)
    return adj


@functools.partial(jax.jit, static_argnames=("num_nodes",))
def smpnn_forward(x, edge_index, params, *, num_nodes):
    hidden_dim = params["w_in"].shape[1]
    output_dim = params["w_ro"].shape[1]
    num_layers = params["gcn_w"].shape[0]

    # Lane-dense padding: every trailing dim AND the node axis -> multiples of
    # 128, so the adjacency (lane dim == nodes, K dim of A @ xw) is unmasked
    # and MXU tiles are full width.
    n_pad = _round_up(max(num_nodes, 128), 128)
    h_pad = _round_up(hidden_dim, 128)
    o_pad = _round_up(output_dim, 128)

    # ---- wrapper-side precompute (plain XLA, f32) ----
    # in_proj moved out of the kernel.
    h0 = jnp.dot(x, params["w_in"], preferred_element_type=jnp.float32) + params["b_in"]
    adj = build_gcn_adjacency(edge_index, num_nodes)

    # Fold BN (eval) into the GCN weight / one shift vector, and LN gamma/beta
    # into W1 / a bias on u (done once, in f32).
    gcn_w_f = params["gcn_w"] * params["bn_scale"]                          # scale output cols
    gcn_shift = params["gcn_b"] * params["bn_scale"] + params["bn_shift"]   # [L,1,H]
    w1_f = params["w1"] * jnp.swapaxes(params["ln_g"], 1, 2)                # scale input rows
    u_bias = jnp.einsum("lxh,lho->lxo", params["ln_b"], params["w1"])       # [L,1,H]

    # Pack the remaining per-layer per-channel vectors into one streamed block.
    vecs = jnp.zeros((num_layers, 8, hidden_dim), jnp.float32)
    vecs = vecs.at[:, 0, :].set(gcn_shift[:, 0, :])
    vecs = vecs.at[:, 1, :].set(u_bias[:, 0, :])

    def pad2(a, r, c, dtype):
        return jnp.pad(a, ((0, r - a.shape[0]), (0, c - a.shape[1]))).astype(dtype)

    def pad3(a, r, c, dtype):
        return jnp.pad(a, ((0, 0), (0, r - a.shape[1]),
                           (0, c - a.shape[2]))).astype(dtype)

    h0_p = pad2(h0, n_pad, h_pad, jnp.float32)
    adj_p = pad2(adj, n_pad, n_pad, jnp.bfloat16)
    gcn_w_p = pad3(gcn_w_f, h_pad, h_pad, jnp.bfloat16)
    w1_p = pad3(w1_f, h_pad, h_pad, jnp.bfloat16)
    w2_p = pad3(params["w2"], h_pad, h_pad, jnp.bfloat16)
    vecs_p = pad3(vecs, 8, h_pad, jnp.float32)
    w_ro_p = pad2(params["w_ro"], h_pad, o_pad, jnp.bfloat16)
    b_ro_p = pad2(params["b_ro"], 1, o_pad, jnp.float32)

    operands = (h0_p, adj_p, gcn_w_p, w1_p, w2_p, vecs_p, w_ro_p, b_ro_p)

    stream3 = lambda shape: pl.BlockSpec(shape, lambda l: (l, 0, 0))
    resident2 = lambda shape: pl.BlockSpec(shape, lambda l: (0, 0))

    in_specs = [
        pl.BlockSpec(memory_space=pl.ANY),   # h0  (HBM; one DMA into h scratch at l==0)
        pl.BlockSpec(memory_space=pl.ANY),   # adj (HBM; one DMA into adj scratch at l==0)
        stream3((1, h_pad, h_pad)),          # gcn_w (BN-folded), streamed per layer
        stream3((1, h_pad, h_pad)),          # w1 (LN-gamma-folded)
        stream3((1, h_pad, h_pad)),          # w2
        stream3((1, 8, h_pad)),              # packed per-layer vectors
        resident2((h_pad, o_pad)),           # w_ro
        resident2((1, o_pad)),               # b_ro
    ]
    out_specs = pl.BlockSpec((n_pad, o_pad), lambda l: (0, 0))

    scratch_shapes = [
        pltpu.VMEM((n_pad, h_pad), jnp.float32),    # node features (persistent)
        pltpu.VMEM((n_pad, n_pad), jnp.bfloat16),   # normalized adjacency (persistent)
    ]

    # VMEM budget from the actual buffers (+ margin), capped below physical VMEM.
    vmem_needed = (
        n_pad * h_pad * 4                              # h scratch
        + n_pad * n_pad * 2                            # adjacency scratch
        + 2 * 3 * h_pad * h_pad * 2                    # double-buffered streamed weights
        + 2 * 8 * h_pad * 4                            # double-buffered packed vectors
        + 2 * (h_pad * o_pad * 2 + 8 * o_pad * 4)      # w_ro / b_ro
        + 2 * n_pad * o_pad * 4                        # output block
    )
    try:
        vmem_cap = int(pltpu.get_tpu_info().vmem_capacity_bytes)
    except Exception:
        vmem_cap = 64 * 1024 * 1024                    # conservative (v7x) fallback
    vmem_limit = min(int(vmem_needed * 1.5) + (4 << 20), vmem_cap - (8 << 20))
    vmem_limit = max(vmem_limit, 16 << 20)

    flops = int(num_layers * (6 * n_pad * h_pad * h_pad + 2 * n_pad * n_pad * h_pad)
                + 2 * n_pad * h_pad * o_pad)
    transcendentals = int(num_layers * (2 * n_pad * h_pad + n_pad))
    bytes_accessed = int(sum(op.size * op.dtype.itemsize for op in operands)
                         + n_pad * o_pad * 4)

    kernel = functools.partial(smpnn_kernel, hidden_real=int(hidden_dim))

    out_pad = pl.pallas_call(
        kernel,
        out_shape=jax.ShapeDtypeStruct((n_pad, o_pad), jnp.float32),
        grid_spec=pltpu.PrefetchScalarGridSpec(
            num_scalar_prefetch=0,
            grid=(num_layers,),
            in_specs=in_specs,
            out_specs=out_specs,
            scratch_shapes=scratch_shapes,
        ),
        compiler_params=pltpu.CompilerParams(
            # Layer axis carries the node-feature scratch -> must be sequential.
            dimension_semantics=("arbitrary",),
            vmem_limit_bytes=vmem_limit,
        ),
        cost_estimate=pl.CostEstimate(
            flops=flops,
            transcendentals=transcendentals,
            bytes_accessed=bytes_accessed,
        ),
    )(*operands)

    return out_pad[:num_nodes, :output_dim]


def smpnn_reference(x, edge_index, params, num_nodes):
    """Pure-JAX f32 reference (matches the PyTorch eval-mode forward)."""
    adj = build_gcn_adjacency(edge_index, num_nodes)
    h = x @ params["w_in"] + params["b_in"]
    for l in range(params["gcn_w"].shape[0]):
        g = adj @ (h @ params["gcn_w"][l]) + params["gcn_b"][l]
        g = g * params["bn_scale"][l] + params["bn_shift"][l]
        g = g * jax.nn.sigmoid(g)
        h = g + h
        mu = jnp.mean(h, axis=-1, keepdims=True)
        var = jnp.mean((h - mu) ** 2, axis=-1, keepdims=True)
        xn = (h - mu) * jax.lax.rsqrt(var + 1e-5) * params["ln_g"][l] + params["ln_b"][l]
        u = xn @ params["w1"][l]
        u = u * jax.nn.sigmoid(u)
        h = u @ params["w2"][l] + h
    return h @ params["w_ro"] + params["b_ro"]


def init_params(key, input_dim, hidden_dim, output_dim, num_layers):
    """Deterministic synthetic parameters; weights stored pre-transposed ([in, out])."""
    ks = jax.random.split(key, 12)
    p = {}
    p["w_in"] = 0.1 * jax.random.normal(ks[0], (input_dim, hidden_dim), jnp.float32)
    p["b_in"] = 0.1 * jax.random.normal(ks[1], (1, hidden_dim), jnp.float32)

    p["gcn_w"] = 0.1 * jax.random.normal(ks[2], (num_layers, hidden_dim, hidden_dim), jnp.float32)
    p["gcn_b"] = 0.1 * jax.random.normal(ks[3], (num_layers, 1, hidden_dim), jnp.float32)

    # BatchNorm1d (eval): gamma, beta, running_mean=0, running_var=1 folded.
    gamma = 1.0 + 0.05 * jax.random.normal(ks[4], (num_layers, 1, hidden_dim), jnp.float32)
    beta = 0.05 * jax.random.normal(ks[5], (num_layers, 1, hidden_dim), jnp.float32)
    run_mean = jnp.zeros((num_layers, 1, hidden_dim), jnp.float32)
    run_var = jnp.ones((num_layers, 1, hidden_dim), jnp.float32)
    scale = gamma * jax.lax.rsqrt(run_var + 1e-5)
    p["bn_scale"] = scale
    p["bn_shift"] = beta - run_mean * scale

    p["ln_g"] = 1.0 + 0.05 * jax.random.normal(ks[6], (num_layers, 1, hidden_dim), jnp.float32)
    p["ln_b"] = 0.05 * jax.random.normal(ks[7], (num_layers, 1, hidden_dim), jnp.float32)
    p["w1"] = 0.1 * jax.random.normal(ks[8], (num_layers, hidden_dim, hidden_dim), jnp.float32)
    p["w2"] = 0.1 * jax.random.normal(ks[9], (num_layers, hidden_dim, hidden_dim), jnp.float32)

    p["w_ro"] = 0.1 * jax.random.normal(ks[10], (hidden_dim, output_dim), jnp.float32)
    p["b_ro"] = 0.1 * jax.random.normal(ks[11], (1, output_dim), jnp.float32)
    return p


if __name__ == "__main__":
    key = jax.random.PRNGKey(0)
    k_x, k_e, k_p = jax.random.split(key, 3)

    num_nodes = 16
    num_edges = 32
    input_dim = 8
    hidden_dim = 32
    output_dim = 4
    num_layers = 2

    x = jax.random.normal(k_x, (num_nodes, input_dim), jnp.float32)
    edge_index = jax.random.randint(k_e, (2, num_edges), 0, num_nodes, dtype=jnp.int32)
    params = init_params(k_p, input_dim, hidden_dim, output_dim, num_layers)

    out = smpnn_forward(x, edge_index, params, num_nodes=num_nodes)
    jax.block_until_ready(out)
    assert out.shape == (num_nodes, output_dim)
    assert bool(jnp.all(jnp.isfinite(out)))

    # Loose tolerance: kernel matmul operands are bf16 (f32 accumulation).
    ref = smpnn_reference(x, edge_index, params, num_nodes)
    err = float(jnp.max(jnp.abs(out - ref)))
    scale = float(jnp.max(jnp.abs(ref))) + 1e-6
    assert err <= 0.05 * scale + 2e-2, (err, scale)

    print("KERNEL_OK")
</pallas_src>

<mosaic_0001>
module attributes {stable_mosaic.version = 11 : i64} {
  func.func private @main(%arg0: i32) attributes {dimension_semantics = [#tpu.dimension_semantics<core_parallel>], iteration_bounds = array<i64: 2>, tpu.core_type = #tpu.core_type<sc_scalar_subcore>, window_params = []} {
    return
  }
}

module attributes {stable_mosaic.version = 11 : i64} {
  func.func private @main(%arg0: i32) attributes {dimension_semantics = [#tpu.dimension_semantics<core_parallel>], iteration_bounds = array<i64: 2>, tpu.core_type = #tpu.core_type<sc_scalar_subcore>, window_params = []} {
    return
  }
}

module attributes {stable_mosaic.version = 11 : i64} {
  func.func @smpnn_kernel(%arg0: i32, %arg1: memref<128x128xf32, #tpu.memory_space<any>>, %arg2: memref<128x128xbf16, #tpu.memory_space<any>>, %arg3: memref<1x128x128xbf16, #tpu.memory_space<vmem>>, %arg4: memref<1x128x128xbf16, #tpu.memory_space<vmem>>, %arg5: memref<1x128x128xbf16, #tpu.memory_space<vmem>>, %arg6: memref<1x8x128xf32, #tpu.memory_space<vmem>>, %arg7: memref<128x128xbf16, #tpu.memory_space<vmem>>, %arg8: memref<1x128xf32, #tpu.memory_space<vmem>>, %arg9: memref<128x128xf32, #tpu.memory_space<vmem>>, %arg10: memref<128x128xf32, #tpu.memory_space<vmem>>, %arg11: memref<128x128xbf16, #tpu.memory_space<vmem>>) attributes {dimension_semantics = [#tpu.dimension_semantics<arbitrary>], iteration_bounds = array<i64: 2>, scalar_prefetch = 0 : i64, scratch_operands = 2 : i64, tpu.core_type = #tpu.core_type<tc>, window_params = [{}, {}, {transform_indices = @transform_2, window_bounds = array<i64: 1, 128, 128>}, {transform_indices = @transform_3, window_bounds = array<i64: 1, 128, 128>}, {transform_indices = @transform_4, window_bounds = array<i64: 1, 128, 128>}, {transform_indices = @transform_5, window_bounds = array<i64: 1, 8, 128>}, {pipeline_mode = #tpu.pipeline_mode<synchronous>, transform_indices = @transform_6, window_bounds = array<i64: 128, 128>}, {pipeline_mode = #tpu.pipeline_mode<synchronous>, transform_indices = @transform_7, window_bounds = array<i64: 1, 128>}, {pipeline_mode = #tpu.pipeline_mode<synchronous>, transform_indices = @transform_8, window_bounds = array<i64: 128, 128>}]} {
    %c0_i32 = arith.constant 0 : i32
    %0 = arith.cmpi eq, %arg0, %c0_i32 : i32
    %1 = arith.extui %0 : i1 to i32
    %c0_i32_0 = arith.constant 0 : i32
    %2 = arith.cmpi ne, %1, %c0_i32_0 : i32
    scf.if %2 {
      "tpu.region"() ({
        %68 = tpu.sem_alloc : memref<!tpu.dma_semaphore, #tpu.memory_space<semaphore_mem>>
        tpu.enqueue_dma source(%arg1 : memref<128x128xf32, #tpu.memory_space<any>>) target(%arg10 : memref<128x128xf32, #tpu.memory_space<vmem>>) target_semaphore(%68 : memref<!tpu.dma_semaphore, #tpu.memory_space<semaphore_mem>>)
        tpu.wait_dma2 semaphore(%68 : memref<!tpu.dma_semaphore, #tpu.memory_space<semaphore_mem>>) src(%arg1 : memref<128x128xf32, #tpu.memory_space<any>>) dst(%arg10 : memref<128x128xf32, #tpu.memory_space<vmem>>)
        tpu.yield
      }) : () -> ()
      "tpu.region"() ({
        %68 = tpu.sem_alloc : memref<!tpu.dma_semaphore, #tpu.memory_space<semaphore_mem>>
        tpu.enqueue_dma source(%arg2 : memref<128x128xbf16, #tpu.memory_space<any>>) target(%arg11 : memref<128x128xbf16, #tpu.memory_space<vmem>>) target_semaphore(%68 : memref<!tpu.dma_semaphore, #tpu.memory_space<semaphore_mem>>)
        tpu.wait_dma2 semaphore(%68 : memref<!tpu.dma_semaphore, #tpu.memory_space<semaphore_mem>>) src(%arg2 : memref<128x128xbf16, #tpu.memory_space<any>>) dst(%arg11 : memref<128x128xbf16, #tpu.memory_space<vmem>>)
        tpu.yield
      }) : () -> ()
    } else {
    }
    %c0 = arith.constant 0 : index
    %c0_1 = arith.constant 0 : index
    %3 = vector.load %arg10[%c0, %c0_1] : memref<128x128xf32, #tpu.memory_space<vmem>>, vector<128x128xf32>
    %c0_2 = arith.constant 0 : index
    %c0_3 = arith.constant 0 : index
    %c0_4 = arith.constant 0 : index
    %4 = vector.load %arg6[%c0_2, %c0_3, %c0_4] : memref<1x8x128xf32, #tpu.memory_space<vmem>>, vector<1x8x128xf32>
    %5 = vector.shape_cast %4 : vector<1x8x128xf32> to vector<8x128xf32>
    %6 = vector.extract_strided_slice %5 {offsets = [0, 0], sizes = [1, 128], strides = [1, 1]} : vector<8x128xf32> to vector<1x128xf32>
    %7 = vector.extract_strided_slice %5 {offsets = [1, 0], sizes = [1, 128], strides = [1, 1]} : vector<8x128xf32> to vector<1x128xf32>
    %8 = arith.truncf %3 : vector<128x128xf32> to vector<128x128xbf16>
    %c0_5 = arith.constant 0 : index
    %c0_6 = arith.constant 0 : index
    %c0_7 = arith.constant 0 : index
    %9 = vector.load %arg3[%c0_5, %c0_6, %c0_7] : memref<1x128x128xbf16, #tpu.memory_space<vmem>>, vector<1x128x128xbf16>
    %10 = vector.shape_cast %9 : vector<1x128x128xbf16> to vector<128x128xbf16>
    %cst = arith.constant dense<0.000000e+00> : vector<128x128xf32>
    %11 = tpu.matmul %8, %10, %cst {dimension_numbers = #tpu.dot_dimension_numbers<[1], [0], [0], [1], [0, 0, 1, 1], [], []>} : vector<128x128xbf16>, vector<128x128xbf16>, vector<128x128xf32> -> vector<128x128xf32>
    %c0_8 = arith.constant 0 : index
    %c0_9 = arith.constant 0 : index
    %12 = vector.load %arg11[%c0_8, %c0_9] : memref<128x128xbf16, #tpu.memory_space<vmem>>, vector<128x128xbf16>
    %13 = arith.truncf %11 : vector<128x128xf32> to vector<128x128xbf16>
    %cst_10 = arith.constant dense<0.000000e+00> : vector<128x128xf32>
    %14 = tpu.matmul %12, %13, %cst_10 {dimension_numbers = #tpu.dot_dimension_numbers<[1], [0], [0], [1], [0, 0, 1, 1], [], []>} : vector<128x128xbf16>, vector<128x128xbf16>, vector<128x128xf32> -> vector<128x128xf32>
    %15 = vector.broadcast %6 : vector<1x128xf32> to vector<128x128xf32>
    %16 = arith.addf %14, %15 : vector<128x128xf32>
    %17 = arith.negf %16 : vector<128x128xf32>
    %18 = math.exp %17 : vector<128x128xf32>
    %cst_11 = arith.constant 1.000000e+00 : f32
    %19 = vector.broadcast %cst_11 : f32 to vector<128x128xf32>
    %20 = arith.addf %19, %18 : vector<128x128xf32>
    %21 = arith.divf %19, %20 : vector<128x128xf32>
    %22 = arith.mulf %16, %21 : vector<128x128xf32>
    %23 = arith.addf %22, %3 : vector<128x128xf32>
    %cst_12 = arith.constant dense<0.000000e+00> : vector<128xf32>
    %24 = vector.multi_reduction <add>, %23, %cst_12 [1] : vector<128x128xf32> to vector<128xf32>
    %25 = vector.shape_cast %24 : vector<128xf32> to vector<128x1xf32>
    %cst_13 = arith.constant 3.125000e-02 : f32
    %26 = vector.broadcast %cst_13 : f32 to vector<128x1xf32>
    %27 = arith.mulf %25, %26 : vector<128x1xf32>
    %28 = vector.broadcast %27 : vector<128x1xf32> to vector<128x128xf32>
    %29 = arith.subf %23, %28 : vector<128x128xf32>
    %30 = tpu.iota {dimensions = array<i32: 1>} : vector<1x128xi32>
    %c32_i32 = arith.constant 32 : i32
    %31 = vector.broadcast %c32_i32 : i32 to vector<1x128xi32>
    %32 = arith.cmpi slt, %30, %31 : vector<1x128xi32>
    %cst_14 = arith.constant 0.000000e+00 : f32
    %33 = vector.shape_cast %32 : vector<1x128xi1> to vector<1x128xi1>
    %34 = vector.broadcast %33 : vector<1x128xi1> to vector<128x128xi1>
    %35 = vector.broadcast %cst_14 : f32 to vector<128x128xf32>
    %36 = arith.select %34, %29, %35 : vector<128x128xi1>, vector<128x128xf32>
    %37 = arith.mulf %36, %36 : vector<128x128xf32>
    %cst_15 = arith.constant dense<0.000000e+00> : vector<128xf32>
    %38 = vector.multi_reduction <add>, %37, %cst_15 [1] : vector<128x128xf32> to vector<128xf32>
    %39 = vector.shape_cast %38 : vector<128xf32> to vector<128x1xf32>
    %cst_16 = arith.constant 3.125000e-02 : f32
    %40 = vector.broadcast %cst_16 : f32 to vector<128x1xf32>
    %41 = arith.mulf %39, %40 : vector<128x1xf32>
    %cst_17 = arith.constant 9.99999974E-6 : f32
    %42 = vector.broadcast %cst_17 : f32 to vector<128x1xf32>
    %43 = arith.addf %41, %42 : vector<128x1xf32>
    %44 = math.rsqrt %43 : vector<128x1xf32>
    %45 = vector.broadcast %44 : vector<128x1xf32> to vector<128x128xf32>
    %46 = arith.mulf %36, %45 : vector<128x128xf32>
    %47 = arith.truncf %46 : vector<128x128xf32> to vector<128x128xbf16>
    %c0_18 = arith.constant 0 : index
    %c0_19 = arith.constant 0 : index
    %c0_20 = arith.constant 0 : index
    %48 = vector.load %arg4[%c0_18, %c0_19, %c0_20] : memref<1x128x128xbf16, #tpu.memory_space<vmem>>, vector<1x128x128xbf16>
    %49 = vector.shape_cast %48 : vector<1x128x128xbf16> to vector<128x128xbf16>
    %cst_21 = arith.constant dense<0.000000e+00> : vector<128x128xf32>
    %50 = tpu.matmul %47, %49, %cst_21 {dimension_numbers = #tpu.dot_dimension_numbers<[1], [0], [0], [1], [0, 0, 1, 1], [], []>} : vector<128x128xbf16>, vector<128x128xbf16>, vector<128x128xf32> -> vector<128x128xf32>
    %51 = vector.broadcast %7 : vector<1x128xf32> to vector<128x128xf32>
    %52 = arith.addf %50, %51 : vector<128x128xf32>
    %53 = arith.negf %52 : vector<128x128xf32>
    %54 = math.exp %53 : vector<128x128xf32>
    %cst_22 = arith.constant 1.000000e+00 : f32
    %55 = vector.broadcast %cst_22 : f32 to vector<128x128xf32>
    %56 = arith.addf %55, %54 : vector<128x128xf32>
    %57 = arith.divf %55, %56 : vector<128x128xf32>
    %58 = arith.mulf %52, %57 : vector<128x128xf32>
    %59 = arith.truncf %58 : vector<128x128xf32> to vector<128x128xbf16>
    %c0_23 = arith.constant 0 : index
    %c0_24 = arith.constant 0 : index
    %c0_25 = arith.constant 0 : index
    %60 = vector.load %arg5[%c0_23, %c0_24, %c0_25] : memref<1x128x128xbf16, #tpu.memory_space<vmem>>, vector<1x128x128xbf16>
    %61 = vector.shape_cast %60 : vector<1x128x128xbf16> to vector<128x128xbf16>
    %cst_26 = arith.constant dense<0.000000e+00> : vector<128x128xf32>
    %62 = tpu.matmul %59, %61, %cst_26 {dimension_numbers = #tpu.dot_dimension_numbers<[1], [0], [0], [1], [0, 0, 1, 1], [], []>} : vector<128x128xbf16>, vector<128x128xbf16>, vector<128x128xf32> -> vector<128x128xf32>
    %63 = arith.addf %62, %23 : vector<128x128xf32>
    %c0_27 = arith.constant 0 : index
    %c0_28 = arith.constant 0 : index
    %64 = vector.load %arg10[%c0_27, %c0_28] : memref<128x128xf32, #tpu.memory_space<vmem>>, vector<128x128xf32>
    tpu.vector_store %arg10[%c0_27, %c0_28], %63 {strides = array<i32>} : memref<128x128xf32, #tpu.memory_space<vmem>>, vector<128x128xf32>,
    %c1_i32 = arith.constant 1 : i32
    %65 = arith.cmpi eq, %arg0, %c1_i32 : i32
    %66 = arith.extui %65 : i1 to i32
    %c0_i32_29 = arith.constant 0 : i32
    %67 = arith.cmpi ne, %66, %c0_i32_29 : i32
    scf.if %67 {
      %68 = arith.truncf %63 : vector<128x128xf32> to vector<128x128xbf16>
      %c0_30 = arith.constant 0 : index
      %c0_31 = arith.constant 0 : index
      %69 = vector.load %arg7[%c0_30, %c0_31] : memref<128x128xbf16, #tpu.memory_space<vmem>>, vector<128x128xbf16>
      %cst_32 = arith.constant dense<0.000000e+00> : vector<128x128xf32>
      %70 = tpu.matmul %68, %69, %cst_32 {dimension_numbers = #tpu.dot_dimension_numbers<[1], [0], [0], [1], [0, 0, 1, 1], [], []>} : vector<128x128xbf16>, vector<128x128xbf16>, vector<128x128xf32> -> vector<128x128xf32>
      %c0_33 = arith.constant 0 : index
      %c0_34 = arith.constant 0 : index
      %71 = vector.load %arg8[%c0_33, %c0_34] : memref<1x128xf32, #tpu.memory_space<vmem>>, vector<1x128xf32>
      %72 = vector.broadcast %71 : vector<1x128xf32> to vector<128x128xf32>
      %73 = arith.addf %70, %72 : vector<128x128xf32>
      %c0_35 = arith.constant 0 : index
      %c0_36 = arith.constant 0 : index
      %74 = vector.load %arg9[%c0_35, %c0_36] : memref<128x128xf32, #tpu.memory_space<vmem>>, vector<128x128xf32>
      tpu.vector_store %arg9[%c0_35, %c0_36], %73 {strides = array<i32>} : memref<128x128xf32, #tpu.memory_space<vmem>>, vector<128x128xf32>,
    } else {
    }
    return
  }
  func.func @transform_2(%arg0: i32) -> (i32, i32, i32) {
    %c0_i32 = arith.constant 0 : i32
    %c0_i32_0 = arith.constant 0 : i32
    %c0_i32_1 = arith.constant 0 : i32
    return %arg0, %c0_i32, %c0_i32_0 : i32, i32, i32
  }
  func.func @transform_3(%arg0: i32) -> (i32, i32, i32) {
    %c0_i32 = arith.constant 0 : i32
    %c0_i32_0 = arith.constant 0 : i32
    %c0_i32_1 = arith.constant 0 : i32
    return %arg0, %c0_i32, %c0_i32_0 : i32, i32, i32
  }
  func.func @transform_4(%arg0: i32) -> (i32, i32, i32) {
    %c0_i32 = arith.constant 0 : i32
    %c0_i32_0 = arith.constant 0 : i32
    %c0_i32_1 = arith.constant 0 : i32
    return %arg0, %c0_i32, %c0_i32_0 : i32, i32, i32
  }
  func.func @transform_5(%arg0: i32) -> (i32, i32, i32) {
    %c0_i32 = arith.constant 0 : i32
    %c0_i32_0 = arith.constant 0 : i32
    %c0_i32_1 = arith.constant 0 : i32
    return %arg0, %c0_i32, %c0_i32_0 : i32, i32, i32
  }
  func.func @transform_6(%arg0: i32) -> (i32, i32) {
    %c0_i32 = arith.constant 0 : i32
    %c0_i32_0 = arith.constant 0 : i32
    %c0_i32_1 = arith.constant 0 : i32
    return %c0_i32, %c0_i32_0 : i32, i32
  }
  func.func @transform_7(%arg0: i32) -> (i32, i32) {
    %c0_i32 = arith.constant 0 : i32
    %c0_i32_0 = arith.constant 0 : i32
    %c0_i32_1 = arith.constant 0 : i32
    return %c0_i32, %c0_i32_0 : i32, i32
  }
  func.func @transform_8(%arg0: i32) -> (i32, i32) {
    %c0_i32 = arith.constant 0 : i32
    %c0_i32_0 = arith.constant 0 : i32
    %c0_i32_1 = arith.constant 0 : i32
    return %c0_i32, %c0_i32_0 : i32, i32
  }
}

</mosaic_0001>

<llo_original>
// kernel: smpnn_forward.1
$region0: #{smpnn_forward.1}
  #allocation0 [shape = 'u32[]', space=smem, size = 0x4, offset = 0x4, fixed_abs, tag = 'smem constant byte address 0x4 - core index']
  #allocation1 [shape = 'u32[144,128]{1,0:T(1,128)}', space=vmem, size = 0x12000, scoped, tag = 'internal scratch']
  #allocation2 [shape = 'f32[128,128]{1,0:T(8,128)}', space=vmem, size = 0x10000, scoped, tag = 'scratch operand']
  #allocation3 [shape = 'bf16[128,128]{1,0:T(16,128)(2,1)}', space=vmem, size = 0x8000, scoped, tag = 'scratch operand']
  #allocation5 [shape = 's32[]', space=sflag, size = 0x4, offset = 0, fixed_abs, tag = 'sflag constant byte address 0x0 - dummy sync flag']
  #allocation7 [shape = 's32[]', space=sflag, size = 0x4, offset = 0, fixed_abs, tag = 'sflag constant byte address 0x0 - dummy sync flag']
  %s0 = inlined_call_operand.vmem [shape: f32[128,128], index: 0, kind: input, shape index: {}]
  %s1 = inlined_call_operand.vmem [shape: bf16[128,128], index: 1, kind: input, shape index: {}]
  %s2 = inlined_call_operand.vmem [shape: bf16[2,128,128], index: 2, kind: input, shape index: {}]
  %s3 = inlined_call_operand.vmem [shape: bf16[2,128,128], index: 3, kind: input, shape index: {}]
  %s4 = inlined_call_operand.vmem [shape: bf16[2,128,128], index: 4, kind: input, shape index: {}]
  %s5 = inlined_call_operand.vmem [shape: f32[2,8,128], index: 5, kind: input, shape index: {}]
  %s6 = inlined_call_operand.vmem [shape: bf16[128,128], index: 6, kind: input, shape index: {}]
  %s7 = inlined_call_operand.vmem [shape: f32[1,128], index: 7, kind: input, shape index: {}]
  %s8 = inlined_call_operand.vmem [shape: f32[128,128], index: 8, kind: output, shape index: {}]
  %s9 = sld [smem:[#allocation0]]
  $region135: #{smpnn_forward.1} parent=0
    _
  %s11 = ssub.s32 1, %s9
  %s12 = scalar_select 0, %s11, %s9
  loop: start=0, step=1, limit=4
  $region2: #{smpnn_forward.1} parent=0 // loop_pre_header
    _
  $region3: #{smpnn_forward.1} parent=0 // loop_header
    %s14 = sphi 0, %s18
    %p15 = scmp.ge.s32.totalorder %s14, 4
    %s24 = sphi 0, %s26
    %s27 = sphi 0, %s24
    %s28 = sphi 0, %s27
    %s44 = sphi 0, %s28
    %s50 = sphi 0, %s52
    %s53 = sphi 0, %s50
    %s54 = sphi 0, %s53
    %s70 = sphi 0, %s54
    %s76 = sphi 0, %s78
    %s79 = sphi 0, %s76
    %s80 = sphi 0, %s79
    %s96 = sphi 0, %s80
    %s102 = sphi 0, %s104
    %s105 = sphi 0, %s102
    %s106 = sphi 0, %s105
    %s122 = sphi 0, %s106
    %s126 = sphi 0, %s126
    %s128 = sphi 0, %s126
    %s129 = sphi 0, %s128
    %s143 = sphi 0, %s129
    %s147 = sphi 0, %s147
    %s149 = sphi 0, %s147
    %s150 = sphi 0, %s149
    %s164 = sphi 0, %s150
    %s168 = sphi 0, %s168
    %s170 = sphi 0, %s168
    %s171 = sphi 0, %s170
    %s185 = sphi 0, %s171
  $region4: #{smpnn_forward.1} parent=0 // loop_header_branch
    %17 = sbr.rel (%p15) target = $region8
  $region5: #{smpnn_forward.1} parent=0 // loop_body
    %s19 = ssub.s32 %s14, 1
    %s20 = ssub.s32 %s14, 2
    %s21 = sadd.s32 %s14, 1
    %s22 = ssub.s32 %s14, %s21
    %p23 = scmp.eq.s32.totalorder %s22, 0
    %s25 = sadd.s32 %s24, 1
    %s26 = scalar_select %p23, %s24, %s25
    %p29 = pneg %p23
    %p30 = scmp.eq.s32.totalorder %s14, 1
    %p31 = por %p29, %p30
    %p32 = scmp.ne.s32.totalorder %s24, %s27
    %p33 = scmp.eq.s32.totalorder %s14, 0
    %p34 = por %p32, %p33
    %p35 = scmp.ne.s32.totalorder %s24, %s27
    %p36 = scmp.eq.s32.totalorder %s19, 1
    %p37 = por %p35, %p36
    %p38 = scmp.ne.s32.totalorder %s27, %s28
    %p39 = scmp.eq.s32.totalorder %s19, 0
    %p40 = por %p38, %p39
    %p41 = scmp.ne.s32.totalorder %s27, %s28
    %p42 = scmp.eq.s32.totalorder %s20, 1
    %p43 = por %p41, %p42
    %p45 = scmp.ne.s32.totalorder %s28, %s44
    %p46 = scmp.eq.s32.totalorder %s20, 0
    %p47 = por %p45, %p46
    %s48 = ssub.s32 %s14, %s21
    %p49 = scmp.eq.s32.totalorder %s48, 0
    %s51 = sadd.s32 %s50, 1
    %s52 = scalar_select %p49, %s50, %s51
    %p55 = pneg %p49
    %p56 = scmp.eq.s32.totalorder %s14, 1
    %p57 = por %p55, %p56
    %p58 = scmp.ne.s32.totalorder %s50, %s53
    %p59 = scmp.eq.s32.totalorder %s14, 0
    %p60 = por %p58, %p59
    %p61 = scmp.ne.s32.totalorder %s50, %s53
    %p62 = scmp.eq.s32.totalorder %s19, 1
    %p63 = por %p61, %p62
    %p64 = scmp.ne.s32.totalorder %s53, %s54
    %p65 = scmp.eq.s32.totalorder %s19, 0
    %p66 = por %p64, %p65
    %p67 = scmp.ne.s32.totalorder %s53, %s54
    %p68 = scmp.eq.s32.totalorder %s20, 1
    %p69 = por %p67, %p68
    %p71 = scmp.ne.s32.totalorder %s54, %s70
    %p72 = scmp.eq.s32.totalorder %s20, 0
    %p73 = por %p71, %p72
    %s74 = ssub.s32 %s14, %s21
    %p75 = scmp.eq.s32.totalorder %s74, 0
    %s77 = sadd.s32 %s76, 1
    %s78 = scalar_select %p75, %s76, %s77
    %p81 = pneg %p75
    %p82 = scmp.eq.s32.totalorder %s14, 1
    %p83 = por %p81, %p82
    %p84 = scmp.ne.s32.totalorder %s76, %s79
    %p85 = scmp.eq.s32.totalorder %s14, 0
    %p86 = por %p84, %p85
    %p87 = scmp.ne.s32.totalorder %s76, %s79
    %p88 = scmp.eq.s32.totalorder %s19, 1
    %p89 = por %p87, %p88
    %p90 = scmp.ne.s32.totalorder %s79, %s80
    %p91 = scmp.eq.s32.totalorder %s19, 0
    %p92 = por %p90, %p91
    %p93 = scmp.ne.s32.totalorder %s79, %s80
    %p94 = scmp.eq.s32.totalorder %s20, 1
    %p95 = por %p93, %p94
    %p97 = scmp.ne.s32.totalorder %s80, %s96
    %p98 = scmp.eq.s32.totalorder %s20, 0
    %p99 = por %p97, %p98
    %s100 = ssub.s32 %s14, %s21
    %p101 = scmp.eq.s32.totalorder %s100, 0
    %s103 = sadd.s32 %s102, 1
    %s104 = scalar_select %p101, %s102, %s103
    %p107 = pneg %p101
    %p108 = scmp.eq.s32.totalorder %s14, 1
    %p109 = por %p107, %p108
    %p110 = scmp.ne.s32.totalorder %s102, %s105
    %p111 = scmp.eq.s32.totalorder %s14, 0
    %p112 = por %p110, %p111
    %p113 = scmp.ne.s32.totalorder %s102, %s105
    %p114 = scmp.eq.s32.totalorder %s19, 1
    %p115 = por %p113, %p114
    %p116 = scmp.ne.s32.totalorder %s105, %s106
    %p117 = scmp.eq.s32.totalorder %s19, 0
    %p118 = por %p116, %p117
    %p119 = scmp.ne.s32.totalorder %s105, %s106
    %p120 = scmp.eq.s32.totalorder %s20, 1
    %p121 = por %p119, %p120
    %p123 = scmp.ne.s32.totalorder %s106, %s122
    %p124 = scmp.eq.s32.totalorder %s20, 0
    %p125 = por %p123, %p124
    %s127 = sadd.s32 %s126, 1
    %p130 = scmp.eq.s32.totalorder %s14, 1
    %p131 = scmp.ne.s32.totalorder %s126, %s128
    %p132 = scmp.eq.s32.totalorder %s14, 0
    %p133 = por %p131, %p132
    %p134 = scmp.ne.s32.totalorder %s126, %s128
    %p135 = scmp.eq.s32.totalorder %s19, 1
    %p136 = por %p134, %p135
    %p137 = scmp.ne.s32.totalorder %s128, %s129
    %p138 = scmp.eq.s32.totalorder %s19, 0
    %p139 = por %p137, %p138
    %p140 = scmp.ne.s32.totalorder %s128, %s129
    %p141 = scmp.eq.s32.totalorder %s20, 1
    %p142 = por %p140, %p141
    %p144 = scmp.ne.s32.totalorder %s129, %s143
    %p145 = scmp.eq.s32.totalorder %s20, 0
    %p146 = por %p144, %p145
    %s148 = sadd.s32 %s147, 1
    %p151 = scmp.eq.s32.totalorder %s14, 1
    %p152 = scmp.ne.s32.totalorder %s147, %s149
    %p153 = scmp.eq.s32.totalorder %s14, 0
    %p154 = por %p152, %p153
    %p155 = scmp.ne.s32.totalorder %s147, %s149
    %p156 = scmp.eq.s32.totalorder %s19, 1
    %p157 = por %p155, %p156
    %p158 = scmp.ne.s32.totalorder %s149, %s150
    %p159 = scmp.eq.s32.totalorder %s19, 0
    %p160 = por %p158, %p159
    %p161 = scmp.ne.s32.totalorder %s149, %s150
    %p162 = scmp.eq.s32.totalorder %s20, 1
    %p163 = por %p161, %p162
    %p165 = scmp.ne.s32.totalorder %s150, %s164
    %p166 = scmp.eq.s32.totalorder %s20, 0
    %p167 = por %p165, %p166
    %s169 = sadd.s32 %s168, 1
    %p172 = scmp.eq.s32.totalorder %s14, 1
    %p173 = scmp.ne.s32.totalorder %s168, %s170
    %p174 = scmp.eq.s32.totalorder %s14, 0
    %p175 = por %p173, %p174
    %p176 = scmp.ne.s32.totalorder %s168, %s170
    %p177 = scmp.eq.s32.totalorder %s19, 1
    %p178 = por %p176, %p177
    %p179 = scmp.ne.s32.totalorder %s170, %s171
    %p180 = scmp.eq.s32.totalorder %s19, 0
    %p181 = por %p179, %p180
    %p182 = scmp.ne.s32.totalorder %s170, %s171
    %p183 = scmp.eq.s32.totalorder %s20, 1
    %p184 = por %p182, %p183
    %p186 = scmp.ne.s32.totalorder %s171, %s185
    %p187 = scmp.eq.s32.totalorder %s20, 0
    %p188 = por %p186, %p187
    %p189 = scmp.le.s32.totalorder 1, %s14
    %p190 = scmp.lt.s32.totalorder %s14, 3
    %p191 = pnand %p189, %p190
    %p192 = pneg %p191
    // Predicated region
    $region9: #{smpnn_forward.1} parent=5 // pred_check
      _
    $region10: #{smpnn_forward.1} parent=5 // pred_check_branch
      %194 = sbr.rel (%p191) target = $region12
    $region11: #{smpnn_forward.1} parent=5 // pred_region
      %s195 = ssub.s32 %s14, 1
      // Predicated region
      $region13: #{smpnn_forward.1} parent=11 // pred_check
        %p196 = pneg %p139
      $region14: #{smpnn_forward.1} parent=11 // pred_check_branch
        %198 = sbr.rel (%p196) target = $region16
      $region15: #{smpnn_forward.1} parent=11 // pred_region
        _
      $region16: #{smpnn_forward.1} parent=11 // pred_fallthru
        _
      // Predicated region
      $region17: #{smpnn_forward.1} parent=11 // pred_check
        %p199 = pneg %p160
      $region18: #{smpnn_forward.1} parent=11 // pred_check_branch
        %201 = sbr.rel (%p199) target = $region20
      $region19: #{smpnn_forward.1} parent=11 // pred_region
        _
      $region20: #{smpnn_forward.1} parent=11 // pred_fallthru
        _
    $region12: #{smpnn_forward.1} parent=5 // pred_fallthru
      _
    %p202 = scmp.lt.s32.totalorder %s14, 2
    // Predicated region
    $region21: #{smpnn_forward.1} parent=5 // pred_check
      %p203 = pneg %p202
    $region22: #{smpnn_forward.1} parent=5 // pred_check_branch
      %205 = sbr.rel (%p203) target = $region24
    $region23: #{smpnn_forward.1} parent=5 // pred_region
      // Predicated region
      $region25: #{smpnn_forward.1} parent=23 // pred_check
        %p206 = pneg %p34
      $region26: #{smpnn_forward.1} parent=23 // pred_check_branch
        %208 = sbr.rel (%p206) target = $region28
      $region27: #{smpnn_forward.1} parent=23 // pred_region
        %p209 = scmp.lt.s32.totalorder %s14, 1
        %s210 = scalar_select %p209, %s14, 1
        %s211 = smul.addr %s210, 16
        %s212 = smul.addr %s211, 4
        %s213 = scalar_lea.vmem %s2, %s212
      $region28: #{smpnn_forward.1} parent=23 // pred_fallthru
        _
      // Predicated region
      $region29: #{smpnn_forward.1} parent=23 // pred_check
        %p214 = pneg %p60
      $region30: #{smpnn_forward.1} parent=23 // pred_check_branch
        %216 = sbr.rel (%p214) target = $region32
      $region31: #{smpnn_forward.1} parent=23 // pred_region
        %p217 = scmp.lt.s32.totalorder %s14, 1
        %s218 = scalar_select %p217, %s14, 1
        %s219 = smul.addr %s218, 16
        %s220 = smul.addr %s219, 4
        %s221 = scalar_lea.vmem %s3, %s220
      $region32: #{smpnn_forward.1} parent=23 // pred_fallthru
        _
      // Predicated region
      $region33: #{smpnn_forward.1} parent=23 // pred_check
        %p222 = pneg %p86
      $region34: #{smpnn_forward.1} parent=23 // pred_check_branch
        %224 = sbr.rel (%p222) target = $region36
      $region35: #{smpnn_forward.1} parent=23 // pred_region
        %p225 = scmp.lt.s32.totalorder %s14, 1
        %s226 = scalar_select %p225, %s14, 1
        %s227 = smul.addr %s226, 16
        %s228 = smul.addr %s227, 4
        %s229 = scalar_lea.vmem %s4, %s228
      $region36: #{smpnn_forward.1} parent=23 // pred_fallthru
        _
      // Predicated region
      $region37: #{smpnn_forward.1} parent=23 // pred_check
        %p230 = pneg %p112
      $region38: #{smpnn_forward.1} parent=23 // pred_check_branch
        %232 = sbr.rel (%p230) target = $region40
      $region39: #{smpnn_forward.1} parent=23 // pred_region
        %p233 = scmp.lt.s32.totalorder %s14, 1
        %s234 = scalar_select %p233, %s14, 1
        %s235 = smul.addr %s234, 8
        %s236 = scalar_lea.vmem %s5, %s235
      $region40: #{smpnn_forward.1} parent=23 // pred_fallthru
        _
    $region24: #{smpnn_forward.1} parent=5 // pred_fallthru
      _
    %p237 = scmp.le.s32.totalorder 1, %s14
    %p238 = scmp.lt.s32.totalorder %s14, 3
    %p239 = pnand %p237, %p238
    %p240 = pneg %p239
    // Predicated region
    $region41: #{smpnn_forward.1} parent=5 // pred_check
      _
    $region42: #{smpnn_forward.1} parent=5 // pred_check_branch
      %242 = sbr.rel (%p239) target = $region44
    $region43: #{smpnn_forward.1} parent=5 // pred_region
      %s243 = ssub.s32 %s14, 1
      %p244 = scmp.lt.s32.totalorder %s19, 1
      %s245 = scalar_select %p244, %s19, 1
      %s246 = smul.addr %s245, 16
      %s247 = smul.addr %s246, 4
      %s248 = scalar_lea.vmem %s2, %s247
      %p249 = pneg %p40
      %p250 = pneg %p37
      %p251 = scmp.lt.s32.totalorder %s19, 1
      %s252 = scalar_select %p251, %s19, 1
      %s253 = smul.addr %s252, 16
      %s254 = smul.addr %s253, 4
      %s255 = scalar_lea.vmem %s3, %s254
      %p256 = pneg %p66
      %p257 = pneg %p63
      %p258 = scmp.lt.s32.totalorder %s19, 1
      %s259 = scalar_select %p258, %s19, 1
      %s260 = smul.addr %s259, 16
      %s261 = smul.addr %s260, 4
      %s262 = scalar_lea.vmem %s4, %s261
      %p263 = pneg %p92
      %p264 = pneg %p89
      %p265 = scmp.lt.s32.totalorder %s19, 1
      %s266 = scalar_select %p265, %s19, 1
      %s267 = smul.addr %s266, 8
      %s268 = scalar_lea.vmem %s5, %s267
      %p269 = pneg %p118
      %p270 = pneg %p115
      %p271 = pneg %p139
      %p272 = pneg %p136
      %p273 = pneg %p160
      %p274 = pneg %p157
      %p275 = pneg %p181
      %p276 = pneg %p178
      %p277 = scmp.lt.s32.totalorder %s19, 1
      %s278 = scalar_select %p277, %s19, 1
      %s279 = smul.addr %s278, 16
      %s280 = smul.addr %s279, 4
      %s281 = scalar_lea.vmem %s2, %s280
      %p282 = scmp.lt.s32.totalorder %s19, 1
      %s283 = scalar_select %p282, %s19, 1
      %s284 = smul.addr %s283, 16
      %s285 = smul.addr %s284, 4
      %s286 = scalar_lea.vmem %s3, %s285
      %p287 = scmp.lt.s32.totalorder %s19, 1
      %s288 = scalar_select %p287, %s19, 1
      %s289 = smul.addr %s288, 16
      %s290 = smul.addr %s289, 4
      %s291 = scalar_lea.vmem %s4, %s290
      %p292 = scmp.lt.s32.totalorder %s19, 1
      %s293 = scalar_select %p292, %s19, 1
      %s294 = smul.addr %s293, 8
      %s295 = scalar_lea.vmem %s5, %s294
      %p297 = scmp.eq.s32.totalorder %s19, 0
      // Predicated region
      $region45: #{smpnn_forward.1} parent=43 // pred_check
        %p298 = pneg %p297
      $region46: #{smpnn_forward.1} parent=43 // pred_check_branch
        %300 = sbr.rel (%p298) target = $region48
      $region47: #{smpnn_forward.1} parent=43 // pred_region
        $region49: #{smpnn_forward.1} parent=47
          #allocation4 [shape = 's32[1]{0}', space=sflag, size = 0x4, scoped, tag = 'scoped memory for smpnn_forward.1']
          %p302 = scmp.lt.u32.totalorder 128, 8
          %p303 = pneg %p302
          // Predicated region
          $region50: #{smpnn_forward.1} parent=49 // pred_check
            _
          $region51: #{smpnn_forward.1} parent=49 // pred_check_branch
            %305 = sbr.rel (%p302) target = $region53
          $region52: #{smpnn_forward.1} parent=49 // pred_region
            %s320 = sand.u32 128, 7
            %p321 = scmp.eq.s32.totalorder %s320, 0
            // Predicated region
            $region65: #{smpnn_forward.1} parent=52 // pred_check
              %p322 = pneg %p321
            $region66: #{smpnn_forward.1} parent=52 // pred_check_branch
              %324 = sbr.rel (%p322) target = $region68
            $region67: #{smpnn_forward.1} parent=52 // pred_region
              loop: start=0, step=1, limit=1
              $region69: #{smpnn_forward.1} parent=67 // loop_pre_header
                _
              $region70: #{smpnn_forward.1} parent=67 // loop_header
                %s326 = sphi 0, %s330
                %p327 = scmp.ge.s32.totalorder %s326, 1
                %s331 = sphi %s0, %s0
                %s332 = sphi [#allocation2], [#allocation2]
              $region71: #{smpnn_forward.1} parent=67 // loop_header_branch
                %329 = sbr.rel (%p327) target = $region75
              $region72: #{smpnn_forward.1} parent=67 // loop_body
                %v333 = vld [vmem:[%s331] sm:$0xff]
                %334 = vst [vmem:[%s332] sm:$0xff] %v333
                %v335 = vld [vmem:[%s331 + $0x8] sm:$0xff]
                %336 = vst [vmem:[%s332 + $0x8] sm:$0xff] %v335
                %v337 = vld [vmem:[%s331 + $0x10] sm:$0xff]
                %338 = vst [vmem:[%s332 + $0x10] sm:$0xff] %v337
                %v339 = vld [vmem:[%s331 + $0x18] sm:$0xff]
                %340 = vst [vmem:[%s332 + $0x18] sm:$0xff] %v339
                %v341 = vld [vmem:[%s331 + $0x20] sm:$0xff]
                %342 = vst [vmem:[%s332 + $0x20] sm:$0xff] %v341
                %v343 = vld [vmem:[%s331 + $0x28] sm:$0xff]
                %344 = vst [vmem:[%s332 + $0x28] sm:$0xff] %v343
                %v345 = vld [vmem:[%s331 + $0x30] sm:$0xff]
                %346 = vst [vmem:[%s332 + $0x30] sm:$0xff] %v345
                %v347 = vld [vmem:[%s331 + $0x38] sm:$0xff]
                %348 = vst [vmem:[%s332 + $0x38] sm:$0xff] %v347
                %v349 = vld [vmem:[%s331 + $0x40] sm:$0xff]
                %350 = vst [vmem:[%s332 + $0x40] sm:$0xff] %v349
                %v351 = vld [vmem:[%s331 + $0x48] sm:$0xff]
                %352 = vst [vmem:[%s332 + $0x48] sm:$0xff] %v351
                %v353 = vld [vmem:[%s331 + $0x50] sm:$0xff]
                %354 = vst [vmem:[%s332 + $0x50] sm:$0xff] %v353
                %v355 = vld [vmem:[%s331 + $0x58] sm:$0xff]
                %356 = vst [vmem:[%s332 + $0x58] sm:$0xff] %v355
                %v357 = vld [vmem:[%s331 + $0x60] sm:$0xff]
                %358 = vst [vmem:[%s332 + $0x60] sm:$0xff] %v357
                %v359 = vld [vmem:[%s331 + $0x68] sm:$0xff]
                %360 = vst [vmem:[%s332 + $0x68] sm:$0xff] %v359
                %v361 = vld [vmem:[%s331 + $0x70] sm:$0xff]
                %362 = vst [vmem:[%s332 + $0x70] sm:$0xff] %v361
                %v363 = vld [vmem:[%s331 + $0x78] sm:$0xff]
                %364 = vst [vmem:[%s332 + $0x78] sm:$0xff] %v363
              $region73: #{smpnn_forward.1} parent=67 // loop_footer
                %s330 = sadd.s32 1, %s326
              $region74: #{smpnn_forward.1} parent=67 // loop_footer_branch
                %325 = sbr.rel target = $region70
              $region75: #{smpnn_forward.1} parent=67 // loop_exit
                _
            $region68: #{smpnn_forward.1} parent=52 // pred_fallthru
              _
            %p365 = pneg %p321
            // Predicated region
            $region76: #{smpnn_forward.1} parent=52 // pred_check
              _
            $region77: #{smpnn_forward.1} parent=52 // pred_check_branch
              %367 = sbr.rel (%p321) target = $region79
            $region78: #{smpnn_forward.1} parent=52 // pred_region
              %s368 = sand.u32 128, 7
            $region79: #{smpnn_forward.1} parent=52 // pred_fallthru
              _
          $region53: #{smpnn_forward.1} parent=49 // pred_fallthru
            _
          // Predicated region
          $region54: #{smpnn_forward.1} parent=49 // pred_check
            %p306 = pneg %p302
          $region55: #{smpnn_forward.1} parent=49 // pred_check_branch
            %308 = sbr.rel (%p306) target = $region57
          $region56: #{smpnn_forward.1} parent=49 // pred_region
            %s309 = sshllo.u32 0, 128
            loop: start=0, step=1, limit=1
            $region58: #{smpnn_forward.1} parent=56 // loop_pre_header
              _
            $region59: #{smpnn_forward.1} parent=56 // loop_header
              %s311 = sphi 0, %s315
              %p312 = scmp.ge.s32.totalorder %s311, 1
              %s316 = sphi %s0, %s0
              %s317 = sphi [#allocation2], [#allocation2]
            $region60: #{smpnn_forward.1} parent=56 // loop_header_branch
              %314 = sbr.rel (%p312) target = $region64
            $region61: #{smpnn_forward.1} parent=56 // loop_body
              %v318 = vld [vmem:[%s316] sm:%s309]
              %319 = vst [vmem:[%s317] sm:%s309] %v318
            $region62: #{smpnn_forward.1} parent=56 // loop_footer
              %s315 = sadd.s32 1, %s311
            $region63: #{smpnn_forward.1} parent=56 // loop_footer_branch
              %310 = sbr.rel target = $region59
            $region64: #{smpnn_forward.1} parent=56 // loop_exit
              _
          $region57: #{smpnn_forward.1} parent=49 // pred_fallthru
            _
          // Predicated region
          $region80: #{smpnn_forward.1} parent=49 // pred_check
            _
          $region81: #{smpnn_forward.1} parent=49 // pred_check_branch
            %371 = sbr.rel (0) target = $region83
          $region82: #{smpnn_forward.1} parent=49 // pred_region
            %372 = vsyncadd [#allocation4], 2048
          $region83: #{smpnn_forward.1} parent=49 // pred_fallthru
            _
          %s373 = smul.u32 128, 1
          %s374 = sshll.u32 %s373, 4
          %375 = dma.done [#allocation4], %s374
        $region84: #{smpnn_forward.1} parent=47
          #allocation6 [shape = 's32[1]{0}', space=sflag, size = 0x4, scoped, tag = 'scoped memory for smpnn_forward.1']
          %p377 = scmp.lt.u32.totalorder 64, 8
          %p378 = pneg %p377
          // Predicated region
          $region85: #{smpnn_forward.1} parent=84 // pred_check
            _
          $region86: #{smpnn_forward.1} parent=84 // pred_check_branch
            %380 = sbr.rel (%p377) target = $region88
          $region87: #{smpnn_forward.1} parent=84 // pred_region
            %s395 = sand.u32 64, 7
            %p396 = scmp.eq.s32.totalorder %s395, 0
            // Predicated region
            $region100: #{smpnn_forward.1} parent=87 // pred_check
              %p397 = pneg %p396
            $region101: #{smpnn_forward.1} parent=87 // pred_check_branch
              %399 = sbr.rel (%p397) target = $region103
            $region102: #{smpnn_forward.1} parent=87 // pred_region
              loop: start=0, step=1, limit=1
              $region104: #{smpnn_forward.1} parent=102 // loop_pre_header
                _
              $region105: #{smpnn_forward.1} parent=102 // loop_header
                %s401 = sphi 0, %s405
                %p402 = scmp.ge.s32.totalorder %s401, 1
                %s406 = sphi %s1, %s1
                %s407 = sphi [#allocation3], [#allocation3]
              $region106: #{smpnn_forward.1} parent=102 // loop_header_branch
                %404 = sbr.rel (%p402) target = $region110
              $region107: #{smpnn_forward.1} parent=102 // loop_body
                %v408 = vld [vmem:[%s406] sm:$0xff]
                %409 = vst [vmem:[%s407] sm:$0xff] %v408
                %v410 = vld [vmem:[%s406 + $0x8] sm:$0xff]
                %411 = vst [vmem:[%s407 + $0x8] sm:$0xff] %v410
                %v412 = vld [vmem:[%s406 + $0x10] sm:$0xff]
                %413 = vst [vmem:[%s407 + $0x10] sm:$0xff] %v412
                %v414 = vld [vmem:[%s406 + $0x18] sm:$0xff]
                %415 = vst [vmem:[%s407 + $0x18] sm:$0xff] %v414
                %v416 = vld [vmem:[%s406 + $0x20] sm:$0xff]
                %417 = vst [vmem:[%s407 + $0x20] sm:$0xff] %v416
                %v418 = vld [vmem:[%s406 + $0x28] sm:$0xff]
                %419 = vst [vmem:[%s407 + $0x28] sm:$0xff] %v418
                %v420 = vld [vmem:[%s406 + $0x30] sm:$0xff]
                %421 = vst [vmem:[%s407 + $0x30] sm:$0xff] %v420
                %v422 = vld [vmem:[%s406 + $0x38] sm:$0xff]
                %423 = vst [vmem:[%s407 + $0x38] sm:$0xff] %v422
              $region108: #{smpnn_forward.1} parent=102 // loop_footer
                %s405 = sadd.s32 1, %s401
              $region109: #{smpnn_forward.1} parent=102 // loop_footer_branch
                %400 = sbr.rel target = $region105
              $region110: #{smpnn_forward.1} parent=102 // loop_exit
                _
            $region103: #{smpnn_forward.1} parent=87 // pred_fallthru
              _
            %p424 = pneg %p396
            // Predicated region
            $region111: #{smpnn_forward.1} parent=87 // pred_check
              _
            $region112: #{smpnn_forward.1} parent=87 // pred_check_branch
              %426 = sbr.rel (%p396) target = $region114
            $region113: #{smpnn_forward.1} parent=87 // pred_region
              %s427 = sand.u32 64, 7
            $region114: #{smpnn_forward.1} parent=87 // pred_fallthru
              _
          $region88: #{smpnn_forward.1} parent=84 // pred_fallthru
            _
          // Predicated region
          $region89: #{smpnn_forward.1} parent=84 // pred_check
            %p381 = pneg %p377
          $region90: #{smpnn_forward.1} parent=84 // pred_check_branch
            %383 = sbr.rel (%p381) target = $region92
          $region91: #{smpnn_forward.1} parent=84 // pred_region
            %s384 = sshllo.u32 0, 64
            loop: start=0, step=1, limit=1
            $region93: #{smpnn_forward.1} parent=91 // loop_pre_header
              _
            $region94: #{smpnn_forward.1} parent=91 // loop_header
              %s386 = sphi 0, %s390
              %p387 = scmp.ge.s32.totalorder %s386, 1
              %s391 = sphi %s1, %s1
              %s392 = sphi [#allocation3], [#allocation3]
            $region95: #{smpnn_forward.1} parent=91 // loop_header_branch
              %389 = sbr.rel (%p387) target = $region99
            $region96: #{smpnn_forward.1} parent=91 // loop_body
              %v393 = vld [vmem:[%s391] sm:%s384]
              %394 = vst [vmem:[%s392] sm:%s384] %v393
            $region97: #{smpnn_forward.1} parent=91 // loop_footer
              %s390 = sadd.s32 1, %s386
            $region98: #{smpnn_forward.1} parent=91 // loop_footer_branch
              %385 = sbr.rel target = $region94
            $region99: #{smpnn_forward.1} parent=91 // loop_exit
              _
          $region92: #{smpnn_forward.1} parent=84 // pred_fallthru
            _
          // Predicated region
          $region115: #{smpnn_forward.1} parent=84 // pred_check
            _
          $region116: #{smpnn_forward.1} parent=84 // pred_check_branch
            %430 = sbr.rel (0) target = $region118
          $region117: #{smpnn_forward.1} parent=84 // pred_region
            %431 = vsyncadd [#allocation6], 1024
          $region118: #{smpnn_forward.1} parent=84 // pred_fallthru
            _
          %s432 = smul.u32 4, 16
          %s433 = smul.u32 %s432, 1
          %s434 = sshll.u32 %s433, 4
          %435 = dma.done [#allocation6], %s434
      $region48: #{smpnn_forward.1} parent=43 // pred_fallthru
        _
      %v436 = vld [vmem:[#allocation2] sm:$0xff]
      %v437 = vld [vmem:[#allocation2 + $0x8] sm:$0xff]
      %v438 = vld [vmem:[#allocation2 + $0x10] sm:$0xff]
      %v439 = vld [vmem:[#allocation2 + $0x18] sm:$0xff]
      %v440 = vld [vmem:[#allocation2 + $0x20] sm:$0xff]
      %v441 = vld [vmem:[#allocation2 + $0x28] sm:$0xff]
      %v442 = vld [vmem:[#allocation2 + $0x30] sm:$0xff]
      %v443 = vld [vmem:[#allocation2 + $0x38] sm:$0xff]
      %v444 = vld [vmem:[#allocation2 + $0x40] sm:$0xff]
      %v445 = vld [vmem:[#allocation2 + $0x48] sm:$0xff]
      %v446 = vld [vmem:[#allocation2 + $0x50] sm:$0xff]
      %v447 = vld [vmem:[#allocation2 + $0x58] sm:$0xff]
      %v448 = vld [vmem:[#allocation2 + $0x60] sm:$0xff]
      %v449 = vld [vmem:[#allocation2 + $0x68] sm:$0xff]
      %v450 = vld [vmem:[#allocation2 + $0x70] sm:$0xff]
      %v451 = vld [vmem:[#allocation2 + $0x78] sm:$0xff]
      %v452 = vld [vmem:[%s295] sm:$0xff]
      %v453 = vpack.c.bf16 %v437, %v436
      %v454 = vpack.c.bf16 %v439, %v438
      %v455 = vpack.c.bf16 %v441, %v440
      %v456 = vpack.c.bf16 %v443, %v442
      %v457 = vpack.c.bf16 %v445, %v444
      %v458 = vpack.c.bf16 %v447, %v446
      %v459 = vpack.c.bf16 %v449, %v448
      %v460 = vpack.c.bf16 %v451, %v450
      %v461 = vld [vmem:[%s281] sm:$0xf]
      %v462 = vld [vmem:[%s281 + $0x4] sm:$0xf]
      %v463 = vld [vmem:[%s281 + $0x8] sm:$0xf]
      %v464 = vld [vmem:[%s281 + $0xc] sm:$0xf]
      %v465 = vld [vmem:[%s281 + $0x10] sm:$0xf]
      %v466 = vld [vmem:[%s281 + $0x14] sm:$0xf]
      %v467 = vld [vmem:[%s281 + $0x18] sm:$0xf]
      %v468 = vld [vmem:[%s281 + $0x1c] sm:$0xf]
      %v469 = vld [vmem:[%s281 + $0x20] sm:$0xf]
      %v470 = vld [vmem:[%s281 + $0x24] sm:$0xf]
      %v471 = vld [vmem:[%s281 + $0x28] sm:$0xf]
      %v472 = vld [vmem:[%s281 + $0x2c] sm:$0xf]
      %v473 = vld [vmem:[%s281 + $0x30] sm:$0xf]
      %v474 = vld [vmem:[%s281 + $0x34] sm:$0xf]
      %v475 = vld [vmem:[%s281 + $0x38] sm:$0xf]
      %v476 = vld [vmem:[%s281 + $0x3c] sm:$0xf]
      %v493 = vunpack.c.l.b16 %v461
      %v494 = vunpack.c.l.b16 %v462
      %v495 = vunpack.c.l.b16 %v463
      %v496 = vunpack.c.l.b16 %v464
      %v497 = vunpack.c.l.b16 %v465
      %v498 = vunpack.c.l.b16 %v466
      %v499 = vunpack.c.l.b16 %v467
      %v500 = vunpack.c.l.b16 %v468
      %v501 = vunpack.c.l.b16 %v469
      %v502 = vunpack.c.l.b16 %v470
      %v503 = vunpack.c.l.b16 %v471
      %v504 = vunpack.c.l.b16 %v472
      %v505 = vunpack.c.l.b16 %v473
      %v506 = vunpack.c.l.b16 %v474
      %v507 = vunpack.c.l.b16 %v475
      %v508 = vunpack.c.l.b16 %v476
      %v509 = vpack.c.b16 %v494, %v493
      %v510 = vpack.c.b16 %v496, %v495
      %v511 = vpack.c.b16 %v498, %v497
      %v512 = vpack.c.b16 %v500, %v499
      %v513 = vpack.c.b16 %v502, %v501
      %v514 = vpack.c.b16 %v504, %v503
      %v515 = vpack.c.b16 %v506, %v505
      %v516 = vpack.c.b16 %v508, %v507
      %525 = vmatprep.subr.bf16.mxu0 0
      %526 = vmatpush1.bf16.msra.mxu0 %v509
      %527 = vmatprep.subr.bf16.mxu0 0
      %528 = vmatpush1.bf16.msra.mxu0 %v510
      %529 = vmatprep.subr.bf16.mxu0 0
      %530 = vmatpush1.bf16.msra.mxu0 %v511
      %531 = vmatprep.subr.bf16.mxu0 0
      %532 = vmatpush1.bf16.msra.mxu0 %v512
      %533 = vmatprep.subr.bf16.mxu0 0
      %534 = vmatpush1.bf16.msra.mxu0 %v513
      %535 = vmatprep.subr.bf16.mxu0 0
      %536 = vmatpush1.bf16.msra.mxu0 %v514
      %537 = vmatprep.subr.bf16.mxu0 0
      %538 = vmatpush1.bf16.msra.mxu0 %v515
      %539 = vmatprep.subr.bf16.mxu0 0
      %540 = vmatpush1.bf16.msra.mxu0 %v516
      %541 = vmatprep.subr.bf16.mxu0 0
      %542 = vmatpush1.bf16.msra.mxu0 0
      %543 = vmatprep.subr.bf16.mxu0 0
      %544 = vmatpush1.bf16.msra.mxu0 0
      %545 = vmatprep.subr.bf16.mxu0 0
      %546 = vmatpush1.bf16.msra.mxu0 0
      %547 = vmatprep.subr.bf16.mxu0 0
      %548 = vmatpush1.bf16.msra.mxu0 0
      %549 = vmatprep.subr.bf16.mxu0 0
      %550 = vmatpush1.bf16.msra.mxu0 0
      %551 = vmatprep.subr.bf16.mxu0 0
      %552 = vmatpush1.bf16.msra.mxu0 0
      %553 = vmatprep.subr.bf16.mxu0 0
      %554 = vmatpush1.bf16.msra.mxu0 0
      %555 = vmatprep.subr.bf16.mxu0 0
      %556 = vmatpush1.bf16.msra.mxu0 0
      %557 = vmatprep.mubr.bf16.mxu0 0
      %558 = vmatmul.mubr.bf16.gmra.mrb[0].mxu0 %v453
      %v559 = vpop.f32.mrb[0].mxu0
      %v560 = vadd.f32 0.0, %v559
      %v561 = vpop.f32.mrb[0].mxu0
      %v562 = vpop.f32.mrb[0].mxu0
      %v563 = vadd.f32 0.0, %v562
      %v564 = vpop.f32.mrb[0].mxu0
      %565 = vmatprep.mubr.bf16.mxu0 0
      %566 = vmatmul.mubr.bf16.gmra.mrb[0].mxu0 %v454
      %v567 = vpop.f32.mrb[0].mxu0
      %v568 = vadd.f32 0.0, %v567
      %v569 = vpop.f32.mrb[0].mxu0
      %v570 = vpop.f32.mrb[0].mxu0
      %v571 = vadd.f32 0.0, %v570
      %v572 = vpop.f32.mrb[0].mxu0
      %573 = vmatprep.mubr.bf16.mxu0 0
      %574 = vmatmul.mubr.bf16.gmra.mrb[0].mxu0 %v455
      %v575 = vpop.f32.mrb[0].mxu0
      %v576 = vadd.f32 0.0, %v575
      %v577 = vpop.f32.mrb[0].mxu0
      %v578 = vpop.f32.mrb[0].mxu0
      %v579 = vadd.f32 0.0, %v578
      %v580 = vpop.f32.mrb[0].mxu0
      %581 = vmatprep.mubr.bf16.mxu0 0
      %582 = vmatmul.mubr.bf16.gmra.mrb[0].mxu0 %v456
      %v583 = vpop.f32.mrb[0].mxu0
      %v584 = vadd.f32 0.0, %v583
      %v585 = vpop.f32.mrb[0].mxu0
      %v586 = vpop.f32.mrb[0].mxu0
      %v587 = vadd.f32 0.0, %v586
      %v588 = vpop.f32.mrb[0].mxu0
      %589 = vmatprep.mubr.bf16.mxu0 0
      %590 = vmatmul.mubr.bf16.gmra.mrb[0].mxu0 %v457
      %v591 = vpop.f32.mrb[0].mxu0
      %v592 = vadd.f32 0.0, %v591
      %v593 = vpop.f32.mrb[0].mxu0
      %v594 = vpop.f32.mrb[0].mxu0
      %v595 = vadd.f32 0.0, %v594
      %v596 = vpop.f32.mrb[0].mxu0
      %597 = vmatprep.mubr.bf16.mxu0 0
      %598 = vmatmul.mubr.bf16.gmra.mrb[0].mxu0 %v458
      %v599 = vpop.f32.mrb[0].mxu0
      %v600 = vadd.f32 0.0, %v599
      %v601 = vpop.f32.mrb[0].mxu0
      %v602 = vpop.f32.mrb[0].mxu0
      %v603 = vadd.f32 0.0, %v602
      %v604 = vpop.f32.mrb[0].mxu0
      %605 = vmatprep.mubr.bf16.mxu0 0
      %606 = vmatmul.mubr.bf16.gmra.mrb[0].mxu0 %v459
      %v607 = vpop.f32.mrb[0].mxu0
      %v608 = vadd.f32 0.0, %v607
      %v609 = vpop.f32.mrb[0].mxu0
      %v610 = vpop.f32.mrb[0].mxu0
      %v611 = vadd.f32 0.0, %v610
      %v612 = vpop.f32.mrb[0].mxu0
      %613 = vmatprep.mubr.bf16.mxu0 0
      %614 = vmatmul.mubr.bf16.gmra.mrb[0].mxu0 %v460
      %v615 = vpop.f32.mrb[0].mxu0
      %v616 = vadd.f32 0.0, %v615
      %v617 = vpop.f32.mrb[0].mxu0
      %v618 = vpop.f32.mrb[0].mxu0
      %v619 = vadd.f32 0.0, %v618
      %v620 = vpop.f32.mrb[0].mxu0
      %621 = vdwg.mxu0
      %v622 = vld [vmem:[#allocation3] sm:$0xff]
      %v623 = vld [vmem:[#allocation3 + $0x8] sm:$0xff]
      %v624 = vld [vmem:[#allocation3 + $0x10] sm:$0xff]
      %v625 = vld [vmem:[#allocation3 + $0x18] sm:$0xff]
      %v626 = vld [vmem:[#allocation3 + $0x20] sm:$0xff]
      %v627 = vld [vmem:[#allocation3 + $0x28] sm:$0xff]
      %v628 = vld [vmem:[#allocation3 + $0x30] sm:$0xff]
      %v629 = vld [vmem:[#allocation3 + $0x38] sm:$0xff]
      %v630 = vpack.c.bf16 %v563, %v560
      %v631 = vpack.c.bf16 %v571, %v568
      %v632 = vpack.c.bf16 %v579, %v576
      %v633 = vpack.c.bf16 %v587, %v584
      %v634 = vpack.c.bf16 %v595, %v592
      %v635 = vpack.c.bf16 %v603, %v600
      %v636 = vpack.c.bf16 %v611, %v608
      %v637 = vpack.c.bf16 %v619, %v616
      %v638 = vlaneseq
      %v639 = vshrl.u32 %v638, 7
      %v640 = vsub.s32 0, %v639
      %v641 = vrot.slane %v452, %v640
      %642 = vmatprep.subr.bf16.mxu0 0
      %643 = vmatpush1.bf16.msra.mxu0 %v630
      %644 = vmatprep.subr.bf16.mxu0 0
      %645 = vmatpush1.bf16.msra.mxu0 %v631
      %646 = vmatprep.subr.bf16.mxu0 0
      %647 = vmatpush1.bf16.msra.mxu0 %v632
      %648 = vmatprep.subr.bf16.mxu0 0
      %649 = vmatpush1.bf16.msra.mxu0 %v633
      %650 = vmatprep.subr.bf16.mxu0 0
      %651 = vmatpush1.bf16.msra.mxu0 %v634
      %652 = vmatprep.subr.bf16.mxu0 0
      %653 = vmatpush1.bf16.msra.mxu0 %v635
      %654 = vmatprep.subr.bf16.mxu0 0
      %655 = vmatpush1.bf16.msra.mxu0 %v636
      %656 = vmatprep.subr.bf16.mxu0 0
      %657 = vmatpush1.bf16.msra.mxu0 %v637
      %658 = vmatprep.subr.bf16.mxu0 0
      %659 = vmatpush1.bf16.msra.mxu0 0
      %660 = vmatprep.subr.bf16.mxu0 0
      %661 = vmatpush1.bf16.msra.mxu0 0
      %662 = vmatprep.subr.bf16.mxu0 0
      %663 = vmatpush1.bf16.msra.mxu0 0
      %664 = vmatprep.subr.bf16.mxu0 0
      %665 = vmatpush1.bf16.msra.mxu0 0
      %666 = vmatprep.subr.bf16.mxu0 0
      %667 = vmatpush1.bf16.msra.mxu0 0
      %668 = vmatprep.subr.bf16.mxu0 0
      %669 = vmatpush1.bf16.msra.mxu0 0
      %670 = vmatprep.subr.bf16.mxu0 0
      %671 = vmatpush1.bf16.msra.mxu0 0
      %672 = vmatprep.subr.bf16.mxu0 0
      %673 = vmatpush1.bf16.msra.mxu0 0
      %674 = vmatprep.mubr.bf16.mxu0 0
      %675 = vmatmul.mubr.bf16.gmra.mrb[0].mxu0 %v622
      %v676 = vpop.f32.mrb[0].mxu0
      %v677 = vadd.f32 %v641, %v676
      %v678 = vpop.f32.mrb[0].mxu0
      %v679 = vpop.f32.mrb[0].mxu0
      %v680 = vadd.f32 %v641, %v679
      %v681 = vpop.f32.mrb[0].mxu0
      %682 = vmatprep.mubr.bf16.mxu0 0
      %683 = vmatmul.mubr.bf16.gmra.mrb[0].mxu0 %v623
      %v684 = vpop.f32.mrb[0].mxu0
      %v685 = vadd.f32 %v641, %v684
      %v686 = vpop.f32.mrb[0].mxu0
      %v687 = vpop.f32.mrb[0].mxu0
      %v688 = vadd.f32 %v641, %v687
      %v689 = vpop.f32.mrb[0].mxu0
      %690 = vmatprep.mubr.bf16.mxu0 0
      %691 = vmatmul.mubr.bf16.gmra.mrb[0].mxu0 %v624
      %v692 = vpop.f32.mrb[0].mxu0
      %v693 = vadd.f32 %v641, %v692
      %v694 = vpop.f32.mrb[0].mxu0
      %v695 = vpop.f32.mrb[0].mxu0
      %v696 = vadd.f32 %v641, %v695
      %v697 = vpop.f32.mrb[0].mxu0
      %698 = vmatprep.mubr.bf16.mxu0 0
      %699 = vmatmul.mubr.bf16.gmra.mrb[0].mxu0 %v625
      %v700 = vpop.f32.mrb[0].mxu0
      %v701 = vadd.f32 %v641, %v700
      %v702 = vpop.f32.mrb[0].mxu0
      %v703 = vpop.f32.mrb[0].mxu0
      %v704 = vadd.f32 %v641, %v703
      %v705 = vpop.f32.mrb[0].mxu0
      %706 = vmatprep.mubr.bf16.mxu0 0
      %707 = vmatmul.mubr.bf16.gmra.mrb[0].mxu0 %v626
      %v708 = vpop.f32.mrb[0].mxu0
      %v709 = vadd.f32 %v641, %v708
      %v710 = vpop.f32.mrb[0].mxu0
      %v711 = vpop.f32.mrb[0].mxu0
      %v712 = vadd.f32 %v641, %v711
      %v713 = vpop.f32.mrb[0].mxu0
      %714 = vmatprep.mubr.bf16.mxu0 0
      %715 = vmatmul.mubr.bf16.gmra.mrb[0].mxu0 %v627
      %v716 = vpop.f32.mrb[0].mxu0
      %v717 = vadd.f32 %v641, %v716
      %v718 = vpop.f32.mrb[0].mxu0
      %v719 = vpop.f32.mrb[0].mxu0
      %v720 = vadd.f32 %v641, %v719
      %v721 = vpop.f32.mrb[0].mxu0
      %722 = vmatprep.mubr.bf16.mxu0 0
      %723 = vmatmul.mubr.bf16.gmra.mrb[0].mxu0 %v628
      %v724 = vpop.f32.mrb[0].mxu0
      %v725 = vadd.f32 %v641, %v724
      %v726 = vpop.f32.mrb[0].mxu0
      %v727 = vpop.f32.mrb[0].mxu0
      %v728 = vadd.f32 %v641, %v727
      %v729 = vpop.f32.mrb[0].mxu0
      %730 = vmatprep.mubr.bf16.mxu0 0
      %731 = vmatmul.mubr.bf16.gmra.mrb[0].mxu0 %v629
      %v732 = vpop.f32.mrb[0].mxu0
      %v733 = vadd.f32 %v641, %v732
      %v734 = vpop.f32.mrb[0].mxu0
      %v735 = vpop.f32.mrb[0].mxu0
      %v736 = vadd.f32 %v641, %v735
      %v737 = vpop.f32.mrb[0].mxu0
      %738 = vdwg.mxu0
      %v739 = vxor.u32 %v677, 2147483648
      %v740 = vxor.u32 %v680, 2147483648
      %v741 = vxor.u32 %v685, 2147483648
      %v742 = vxor.u32 %v688, 2147483648
      %v743 = vxor.u32 %v693, 2147483648
      %v744 = vxor.u32 %v696, 2147483648
      %v745 = vxor.u32 %v701, 2147483648
      %v746 = vxor.u32 %v704, 2147483648
      %v747 = vxor.u32 %v709, 2147483648
      %v748 = vxor.u32 %v712, 2147483648
      %v749 = vxor.u32 %v717, 2147483648
      %v750 = vxor.u32 %v720, 2147483648
      %v751 = vxor.u32 %v725, 2147483648
      %v752 = vxor.u32 %v728, 2147483648
      %v753 = vxor.u32 %v733, 2147483648
      %v754 = vxor.u32 %v736, 2147483648
      %v755 = vmul.f32 %v739, 1.442695
      %v756 = vpow.pop %v755
      %v757 = vmul.f32 %v740, 1.442695
      %v758 = vpow.pop %v757
      %v759 = vmul.f32 %v741, 1.442695
      %v760 = vpow.pop %v759
      %v761 = vmul.f32 %v742, 1.442695
      %v762 = vpow.pop %v761
      %v763 = vmul.f32 %v743, 1.442695
      %v764 = vpow.pop %v763
      %v765 = vmul.f32 %v744, 1.442695
      %v766 = vpow.pop %v765
      %v767 = vmul.f32 %v745, 1.442695
      %v768 = vpow.pop %v767
      %v769 = vmul.f32 %v746, 1.442695
      %v770 = vpow.pop %v769
      %v771 = vmul.f32 %v747, 1.442695
      %v772 = vpow.pop %v771
      %v773 = vmul.f32 %v748, 1.442695
      %v774 = vpow.pop %v773
      %v775 = vmul.f32 %v749, 1.442695
      %v776 = vpow.pop %v775
      %v777 = vmul.f32 %v750, 1.442695
      %v778 = vpow.pop %v777
      %v779 = vmul.f32 %v751, 1.442695
      %v780 = vpow.pop %v779
      %v781 = vmul.f32 %v752, 1.442695
      %v782 = vpow.pop %v781
      %v783 = vmul.f32 %v753, 1.442695
      %v784 = vpow.pop %v783
      %v785 = vmul.f32 %v754, 1.442695
      %v786 = vpow.pop %v785
      %v787 = vadd.f32 %v756, 1.0
      %v788 = vadd.f32 %v758, 1.0
      %v789 = vadd.f32 %v760, 1.0
      %v790 = vadd.f32 %v762, 1.0
      %v791 = vadd.f32 %v764, 1.0
      %v792 = vadd.f32 %v766, 1.0
      %v793 = vadd.f32 %v768, 1.0
      %v794 = vadd.f32 %v770, 1.0
      %v795 = vadd.f32 %v772, 1.0
      %v796 = vadd.f32 %v774, 1.0
      %v797 = vadd.f32 %v776, 1.0
      %v798 = vadd.f32 %v778, 1.0
      %v799 = vadd.f32 %v780, 1.0
      %v800 = vadd.f32 %v782, 1.0
      %v801 = vadd.f32 %v784, 1.0
      %v802 = vadd.f32 %v786, 1.0
      %v803 = vrcp.pop %v787
      %v804 = vmul.f32 1.0, %v803
      %v805 = vrcp.pop %v788
      %v806 = vmul.f32 1.0, %v805
      %v807 = vrcp.pop %v789
      %v808 = vmul.f32 1.0, %v807
      %v809 = vrcp.pop %v790
      %v810 = vmul.f32 1.0, %v809
      %v811 = vrcp.pop %v791
      %v812 = vmul.f32 1.0, %v811
      %v813 = vrcp.pop %v792
      %v814 = vmul.f32 1.0, %v813
      %v815 = vrcp.pop %v793
      %v816 = vmul.f32 1.0, %v815
      %v817 = vrcp.pop %v794
      %v818 = vmul.f32 1.0, %v817
      %v819 = vrcp.pop %v795
      %v820 = vmul.f32 1.0, %v819
      %v821 = vrcp.pop %v796
      %v822 = vmul.f32 1.0, %v821
      %v823 = vrcp.pop %v797
      %v824 = vmul.f32 1.0, %v823
      %v825 = vrcp.pop %v798
      %v826 = vmul.f32 1.0, %v825
      %v827 = vrcp.pop %v799
      %v828 = vmul.f32 1.0, %v827
      %v829 = vrcp.pop %v800
      %v830 = vmul.f32 1.0, %v829
      %v831 = vrcp.pop %v801
      %v832 = vmul.f32 1.0, %v831
      %v833 = vrcp.pop %v802
      %v834 = vmul.f32 1.0, %v833
      %v835 = vmul.f32 %v677, %v804
      %v836 = vmul.f32 %v680, %v806
      %v837 = vmul.f32 %v685, %v808
      %v838 = vmul.f32 %v688, %v810
      %v839 = vmul.f32 %v693, %v812
      %v840 = vmul.f32 %v696, %v814
      %v841 = vmul.f32 %v701, %v816
      %v842 = vmul.f32 %v704, %v818
      %v843 = vmul.f32 %v709, %v820
      %v844 = vmul.f32 %v712, %v822
      %v845 = vmul.f32 %v717, %v824
      %v846 = vmul.f32 %v720, %v826
      %v847 = vmul.f32 %v725, %v828
      %v848 = vmul.f32 %v728, %v830
      %v849 = vmul.f32 %v733, %v832
      %v850 = vmul.f32 %v736, %v834
      %v851 = vadd.f32 %v835, %v436
      %v852 = vadd.f32 %v836, %v437
      %v853 = vadd.f32 %v837, %v438
      %v854 = vadd.f32 %v838, %v439
      %v855 = vadd.f32 %v839, %v440
      %v856 = vadd.f32 %v840, %v441
      %v857 = vadd.f32 %v841, %v442
      %v858 = vadd.f32 %v842, %v443
      %v859 = vadd.f32 %v843, %v444
      %v860 = vadd.f32 %v844, %v445
      %v861 = vadd.f32 %v845, %v446
      %v862 = vadd.f32 %v846, %v447
      %v863 = vadd.f32 %v847, %v448
      %v864 = vadd.f32 %v848, %v449
      %v865 = vadd.f32 %v849, %v450
      %v866 = vadd.f32 %v850, %v451
      %867 = vadd.xlane.f32.xlu0 %v851
      %v868 = vpop.xlane.xlu0 %867
      %869 = vadd.xlane.f32.xlu0 %v852
      %v870 = vpop.xlane.xlu0 %869
      %871 = vadd.xlane.f32.xlu0 %v853
      %v872 = vpop.xlane.xlu0 %871
      %873 = vadd.xlane.f32.xlu0 %v854
      %v874 = vpop.xlane.xlu0 %873
      %875 = vadd.xlane.f32.xlu0 %v855
      %v876 = vpop.xlane.xlu0 %875
      %877 = vadd.xlane.f32.xlu0 %v856
      %v878 = vpop.xlane.xlu0 %877
      %879 = vadd.xlane.f32.xlu0 %v857
      %v880 = vpop.xlane.xlu0 %879
      %881 = vadd.xlane.f32.xlu0 %v858
      %v882 = vpop.xlane.xlu0 %881
      %883 = vadd.xlane.f32.xlu0 %v859
      %v884 = vpop.xlane.xlu0 %883
      %885 = vadd.xlane.f32.xlu0 %v860
      %v886 = vpop.xlane.xlu0 %885
      %887 = vadd.xlane.f32.xlu0 %v861
      %v888 = vpop.xlane.xlu0 %887
      %889 = vadd.xlane.f32.xlu0 %v862
      %v890 = vpop.xlane.xlu0 %889
      %891 = vadd.xlane.f32.xlu0 %v863
      %v892 = vpop.xlane.xlu0 %891
      %893 = vadd.xlane.f32.xlu0 %v864
      %v894 = vpop.xlane.xlu0 %893
      %895 = vadd.xlane.f32.xlu0 %v865
      %v896 = vpop.xlane.xlu0 %895
      %897 = vadd.xlane.f32.xlu0 %v866
      %v898 = vpop.xlane.xlu0 %897
      %v899 = vmul.f32 %v868, 0.03125
      %v900 = vmul.f32 %v870, 0.03125
      %v901 = vmul.f32 %v872, 0.03125
      %v902 = vmul.f32 %v874, 0.03125
      %v903 = vmul.f32 %v876, 0.03125
      %v904 = vmul.f32 %v878, 0.03125
      %v905 = vmul.f32 %v880, 0.03125
      %v906 = vmul.f32 %v882, 0.03125
      %v907 = vmul.f32 %v884, 0.03125
      %v908 = vmul.f32 %v886, 0.03125
      %v909 = vmul.f32 %v888, 0.03125
      %v910 = vmul.f32 %v890, 0.03125
      %v911 = vmul.f32 %v892, 0.03125
      %v912 = vmul.f32 %v894, 0.03125
      %v913 = vmul.f32 %v896, 0.03125
      %v914 = vmul.f32 %v898, 0.03125
      %v915 = vsub.f32 %v851, %v899
      %v916 = vsub.f32 %v852, %v900
      %v917 = vsub.f32 %v853, %v901
      %v918 = vsub.f32 %v854, %v902
      %v919 = vsub.f32 %v855, %v903
      %v920 = vsub.f32 %v856, %v904
      %v921 = vsub.f32 %v857, %v905
      %v922 = vsub.f32 %v858, %v906
      %v923 = vsub.f32 %v859, %v907
      %v924 = vsub.f32 %v860, %v908
      %v925 = vsub.f32 %v861, %v909
      %v926 = vsub.f32 %v862, %v910
      %v927 = vsub.f32 %v863, %v911
      %v928 = vsub.f32 %v864, %v912
      %v929 = vsub.f32 %v865, %v913
      %v930 = vsub.f32 %v866, %v914
      %v931 = vlaneseq
      %v932 = vand.u32 %v931, 127
      %vm933 = vcmp.lt.s32.totalorder %v932, 32
      %v934 = vsel %vm933, 1, 0
      %vm935 = vcmp.eq.s32.totalorder %v934, 1
      %v936 = vsel %vm935, %v915, 0.0
      %v937 = vsel %vm935, %v916, 0.0
      %v938 = vsel %vm935, %v917, 0.0
      %v939 = vsel %vm935, %v918, 0.0
      %v940 = vsel %vm935, %v919, 0.0
      %v941 = vsel %vm935, %v920, 0.0
      %v942 = vsel %vm935, %v921, 0.0
      %v943 = vsel %vm935, %v922, 0.0
      %v944 = vsel %vm935, %v923, 0.0
      %v945 = vsel %vm935, %v924, 0.0
      %v946 = vsel %vm935, %v925, 0.0
      %v947 = vsel %vm935, %v926, 0.0
      %v948 = vsel %vm935, %v927, 0.0
      %v949 = vsel %vm935, %v928, 0.0
      %v950 = vsel %vm935, %v929, 0.0
      %v951 = vsel %vm935, %v930, 0.0
      %v952 = vmul.f32 %v936, %v936
      %v953 = vmul.f32 %v937, %v937
      %v954 = vmul.f32 %v938, %v938
      %v955 = vmul.f32 %v939, %v939
      %v956 = vmul.f32 %v940, %v940
      %v957 = vmul.f32 %v941, %v941
      %v958 = vmul.f32 %v942, %v942
      %v959 = vmul.f32 %v943, %v943
      %v960 = vmul.f32 %v944, %v944
      %v961 = vmul.f32 %v945, %v945
      %v962 = vmul.f32 %v946, %v946
      %v963 = vmul.f32 %v947, %v947
      %v964 = vmul.f32 %v948, %v948
      %v965 = vmul.f32 %v949, %v949
      %v966 = vmul.f32 %v950, %v950
      %v967 = vmul.f32 %v951, %v951
      %968 = vadd.xlane.f32.xlu0 %v952
      %v969 = vpop.xlane.xlu0 %968
      %970 = vadd.xlane.f32.xlu0 %v953
      %v971 = vpop.xlane.xlu0 %970
      %972 = vadd.xlane.f32.xlu0 %v954
      %v973 = vpop.xlane.xlu0 %972
      %974 = vadd.xlane.f32.xlu0 %v955
      %v975 = vpop.xlane.xlu0 %974
      %976 = vadd.xlane.f32.xlu0 %v956
      %v977 = vpop.xlane.xlu0 %976
      %978 = vadd.xlane.f32.xlu0 %v957
      %v979 = vpop.xlane.xlu0 %978
      %980 = vadd.xlane.f32.xlu0 %v958
      %v981 = vpop.xlane.xlu0 %980
      %982 = vadd.xlane.f32.xlu0 %v959
      %v983 = vpop.xlane.xlu0 %982
      %984 = vadd.xlane.f32.xlu0 %v960
      %v985 = vpop.xlane.xlu0 %984
      %986 = vadd.xlane.f32.xlu0 %v961
      %v987 = vpop.xlane.xlu0 %986
      %988 = vadd.xlane.f32.xlu0 %v962
      %v989 = vpop.xlane.xlu0 %988
      %990 = vadd.xlane.f32.xlu0 %v963
      %v991 = vpop.xlane.xlu0 %990
      %992 = vadd.xlane.f32.xlu0 %v964
      %v993 = vpop.xlane.xlu0 %992
      %994 = vadd.xlane.f32.xlu0 %v965
      %v995 = vpop.xlane.xlu0 %994
      %996 = vadd.xlane.f32.xlu0 %v966
      %v997 = vpop.xlane.xlu0 %996
      %998 = vadd.xlane.f32.xlu0 %v967
      %v999 = vpop.xlane.xlu0 %998
      %v1000 = vmul.f32 %v969, 0.03125
      %v1001 = vmul.f32 %v971, 0.03125
      %v1002 = vmul.f32 %v973, 0.03125
      %v1003 = vmul.f32 %v975, 0.03125
      %v1004 = vmul.f32 %v977, 0.03125
      %v1005 = vmul.f32 %v979, 0.03125
      %v1006 = vmul.f32 %v981, 0.03125
      %v1007 = vmul.f32 %v983, 0.03125
      %v1008 = vmul.f32 %v985, 0.03125
      %v1009 = vmul.f32 %v987, 0.03125
      %v1010 = vmul.f32 %v989, 0.03125
      %v1011 = vmul.f32 %v991, 0.03125
      %v1012 = vmul.f32 %v993, 0.03125
      %v1013 = vmul.f32 %v995, 0.03125
      %v1014 = vmul.f32 %v997, 0.03125
      %v1015 = vmul.f32 %v999, 0.03125
      %v1016 = vadd.f32 %v1000, 1e-05
      %v1017 = vadd.f32 %v1001, 1e-05
      %v1018 = vadd.f32 %v1002, 1e-05
      %v1019 = vadd.f32 %v1003, 1e-05
      %v1020 = vadd.f32 %v1004, 1e-05
      %v1021 = vadd.f32 %v1005, 1e-05
      %v1022 = vadd.f32 %v1006, 1e-05
      %v1023 = vadd.f32 %v1007, 1e-05
      %v1024 = vadd.f32 %v1008, 1e-05
      %v1025 = vadd.f32 %v1009, 1e-05
      %v1026 = vadd.f32 %v1010, 1e-05
      %v1027 = vadd.f32 %v1011, 1e-05
      %v1028 = vadd.f32 %v1012, 1e-05
      %v1029 = vadd.f32 %v1013, 1e-05
      %v1030 = vadd.f32 %v1014, 1e-05
      %v1031 = vadd.f32 %v1015, 1e-05
      %v1032 = vrsqrt.pop %v1016
      %v1033 = vrsqrt.pop %v1017
      %v1034 = vrsqrt.pop %v1018
      %v1035 = vrsqrt.pop %v1019
      %v1036 = vrsqrt.pop %v1020
      %v1037 = vrsqrt.pop %v1021
      %v1038 = vrsqrt.pop %v1022
      %v1039 = vrsqrt.pop %v1023
      %v1040 = vrsqrt.pop %v1024
      %v1041 = vrsqrt.pop %v1025
      %v1042 = vrsqrt.pop %v1026
      %v1043 = vrsqrt.pop %v1027
      %v1044 = vrsqrt.pop %v1028
      %v1045 = vrsqrt.pop %v1029
      %v1046 = vrsqrt.pop %v1030
      %v1047 = vrsqrt.pop %v1031
      %v1048 = vmul.f32 %v936, %v1032
      %v1049 = vmul.f32 %v937, %v1033
      %v1050 = vmul.f32 %v938, %v1034
      %v1051 = vmul.f32 %v939, %v1035
      %v1052 = vmul.f32 %v940, %v1036
      %v1053 = vmul.f32 %v941, %v1037
      %v1054 = vmul.f32 %v942, %v1038
      %v1055 = vmul.f32 %v943, %v1039
      %v1056 = vmul.f32 %v944, %v1040
      %v1057 = vmul.f32 %v945, %v1041
      %v1058 = vmul.f32 %v946, %v1042
      %v1059 = vmul.f32 %v947, %v1043
      %v1060 = vmul.f32 %v948, %v1044
      %v1061 = vmul.f32 %v949, %v1045
      %v1062 = vmul.f32 %v950, %v1046
      %v1063 = vmul.f32 %v951, %v1047
      %v1064 = vpack.c.bf16 %v1049, %v1048
      %v1065 = vpack.c.bf16 %v1051, %v1050
      %v1066 = vpack.c.bf16 %v1053, %v1052
      %v1067 = vpack.c.bf16 %v1055, %v1054
      %v1068 = vpack.c.bf16 %v1057, %v1056
      %v1069 = vpack.c.bf16 %v1059, %v1058
      %v1070 = vpack.c.bf16 %v1061, %v1060
      %v1071 = vpack.c.bf16 %v1063, %v1062
      %v1072 = vld [vmem:[%s286] sm:$0xf]
      %v1073 = vld [vmem:[%s286 + $0x4] sm:$0xf]
      %v1074 = vld [vmem:[%s286 + $0x8] sm:$0xf]
      %v1075 = vld [vmem:[%s286 + $0xc] sm:$0xf]
      %v1076 = vld [vmem:[%s286 + $0x10] sm:$0xf]
      %v1077 = vld [vmem:[%s286 + $0x14] sm:$0xf]
      %v1078 = vld [vmem:[%s286 + $0x18] sm:$0xf]
      %v1079 = vld [vmem:[%s286 + $0x1c] sm:$0xf]
      %v1080 = vld [vmem:[%s286 + $0x20] sm:$0xf]
      %v1081 = vld [vmem:[%s286 + $0x24] sm:$0xf]
      %v1082 = vld [vmem:[%s286 + $0x28] sm:$0xf]
      %v1083 = vld [vmem:[%s286 + $0x2c] sm:$0xf]
      %v1084 = vld [vmem:[%s286 + $0x30] sm:$0xf]
      %v1085 = vld [vmem:[%s286 + $0x34] sm:$0xf]
      %v1086 = vld [vmem:[%s286 + $0x38] sm:$0xf]
      %v1087 = vld [vmem:[%s286 + $0x3c] sm:$0xf]
      %v1088 = vlaneseq
      %v1089 = vshrl.u32 %v1088, 7
      %v1090 = vsub.s32 1, %v1089
      %v1091 = vrot.slane %v452, %v1090
      %v1108 = vunpack.c.l.b16 %v1072
      %v1109 = vunpack.c.l.b16 %v1073
      %v1110 = vunpack.c.l.b16 %v1074
      %v1111 = vunpack.c.l.b16 %v1075
      %v1112 = vunpack.c.l.b16 %v1076
      %v1113 = vunpack.c.l.b16 %v1077
      %v1114 = vunpack.c.l.b16 %v1078
      %v1115 = vunpack.c.l.b16 %v1079
      %v1116 = vunpack.c.l.b16 %v1080
      %v1117 = vunpack.c.l.b16 %v1081
      %v1118 = vunpack.c.l.b16 %v1082
      %v1119 = vunpack.c.l.b16 %v1083
      %v1120 = vunpack.c.l.b16 %v1084
      %v1121 = vunpack.c.l.b16 %v1085
      %v1122 = vunpack.c.l.b16 %v1086
      %v1123 = vunpack.c.l.b16 %v1087
      %v1124 = vpack.c.b16 %v1109, %v1108
      %v1125 = vpack.c.b16 %v1111, %v1110
      %v1126 = vpack.c.b16 %v1113, %v1112
      %v1127 = vpack.c.b16 %v1115, %v1114
      %v1128 = vpack.c.b16 %v1117, %v1116
      %v1129 = vpack.c.b16 %v1119, %v1118
      %v1130 = vpack.c.b16 %v1121, %v1120
      %v1131 = vpack.c.b16 %v1123, %v1122
      %1140 = vmatprep.subr.bf16.mxu0 0
      %1141 = vmatpush1.bf16.msra.mxu0 %v1124
      %1142 = vmatprep.subr.bf16.mxu0 0
      %1143 = vmatpush1.bf16.msra.mxu0 %v1125
      %1144 = vmatprep.subr.bf16.mxu0 0
      %1145 = vmatpush1.bf16.msra.mxu0 %v1126
      %1146 = vmatprep.subr.bf16.mxu0 0
      %1147 = vmatpush1.bf16.msra.mxu0 %v1127
      %1148 = vmatprep.subr.bf16.mxu0 0
      %1149 = vmatpush1.bf16.msra.mxu0 %v1128
      %1150 = vmatprep.subr.bf16.mxu0 0
      %1151 = vmatpush1.bf16.msra.mxu0 %v1129
      %1152 = vmatprep.subr.bf16.mxu0 0
      %1153 = vmatpush1.bf16.msra.mxu0 %v1130
      %1154 = vmatprep.subr.bf16.mxu0 0
      %1155 = vmatpush1.bf16.msra.mxu0 %v1131
      %1156 = vmatprep.subr.bf16.mxu0 0
      %1157 = vmatpush1.bf16.msra.mxu0 0
      %1158 = vmatprep.subr.bf16.mxu0 0
      %1159 = vmatpush1.bf16.msra.mxu0 0
      %1160 = vmatprep.subr.bf16.mxu0 0
      %1161 = vmatpush1.bf16.msra.mxu0 0
      %1162 = vmatprep.subr.bf16.mxu0 0
      %1163 = vmatpush1.bf16.msra.mxu0 0
      %1164 = vmatprep.subr.bf16.mxu0 0
      %1165 = vmatpush1.bf16.msra.mxu0 0
      %1166 = vmatprep.subr.bf16.mxu0 0
      %1167 = vmatpush1.bf16.msra.mxu0 0
      %1168 = vmatprep.subr.bf16.mxu0 0
      %1169 = vmatpush1.bf16.msra.mxu0 0
      %1170 = vmatprep.subr.bf16.mxu0 0
      %1171 = vmatpush1.bf16.msra.mxu0 0
      %1172 = vmatprep.mubr.bf16.mxu0 0
      %1173 = vmatmul.mubr.bf16.gmra.mrb[0].mxu0 %v1064
      %v1174 = vpop.f32.mrb[0].mxu0
      %v1175 = vadd.f32 %v1091, %v1174
      %v1176 = vpop.f32.mrb[0].mxu0
      %v1177 = vpop.f32.mrb[0].mxu0
      %v1178 = vadd.f32 %v1091, %v1177
      %v1179 = vpop.f32.mrb[0].mxu0
      %1180 = vmatprep.mubr.bf16.mxu0 0
      %1181 = vmatmul.mubr.bf16.gmra.mrb[0].mxu0 %v1065
      %v1182 = vpop.f32.mrb[0].mxu0
      %v1183 = vadd.f32 %v1091, %v1182
      %v1184 = vpop.f32.mrb[0].mxu0
      %v1185 = vpop.f32.mrb[0].mxu0
      %v1186 = vadd.f32 %v1091, %v1185
      %v1187 = vpop.f32.mrb[0].mxu0
      %1188 = vmatprep.mubr.bf16.mxu0 0
      %1189 = vmatmul.mubr.bf16.gmra.mrb[0].mxu0 %v1066
      %v1190 = vpop.f32.mrb[0].mxu0
      %v1191 = vadd.f32 %v1091, %v1190
      %v1192 = vpop.f32.mrb[0].mxu0
      %v1193 = vpop.f32.mrb[0].mxu0
      %v1194 = vadd.f32 %v1091, %v1193
      %v1195 = vpop.f32.mrb[0].mxu0
      %1196 = vmatprep.mubr.bf16.mxu0 0
      %1197 = vmatmul.mubr.bf16.gmra.mrb[0].mxu0 %v1067
      %v1198 = vpop.f32.mrb[0].mxu0
      %v1199 = vadd.f32 %v1091, %v1198
      %v1200 = vpop.f32.mrb[0].mxu0
      %v1201 = vpop.f32.mrb[0].mxu0
      %v1202 = vadd.f32 %v1091, %v1201
      %v1203 = vpop.f32.mrb[0].mxu0
      %1204 = vmatprep.mubr.bf16.mxu0 0
      %1205 = vmatmul.mubr.bf16.gmra.mrb[0].mxu0 %v1068
      %v1206 = vpop.f32.mrb[0].mxu0
      %v1207 = vadd.f32 %v1091, %v1206
      %v1208 = vpop.f32.mrb[0].mxu0
      %v1209 = vpop.f32.mrb[0].mxu0
      %v1210 = vadd.f32 %v1091, %v1209
      %v1211 = vpop.f32.mrb[0].mxu0
      %1212 = vmatprep.mubr.bf16.mxu0 0
      %1213 = vmatmul.mubr.bf16.gmra.mrb[0].mxu0 %v1069
      %v1214 = vpop.f32.mrb[0].mxu0
      %v1215 = vadd.f32 %v1091, %v1214
      %v1216 = vpop.f32.mrb[0].mxu0
      %v1217 = vpop.f32.mrb[0].mxu0
      %v1218 = vadd.f32 %v1091, %v1217
      %v1219 = vpop.f32.mrb[0].mxu0
      %1220 = vmatprep.mubr.bf16.mxu0 0
      %1221 = vmatmul.mubr.bf16.gmra.mrb[0].mxu0 %v1070
      %v1222 = vpop.f32.mrb[0].mxu0
      %v1223 = vadd.f32 %v1091, %v1222
      %v1224 = vpop.f32.mrb[0].mxu0
      %v1225 = vpop.f32.mrb[0].mxu0
      %v1226 = vadd.f32 %v1091, %v1225
      %v1227 = vpop.f32.mrb[0].mxu0
      %1228 = vmatprep.mubr.bf16.mxu0 0
      %1229 = vmatmul.mubr.bf16.gmra.mrb[0].mxu0 %v1071
      %v1230 = vpop.f32.mrb[0].mxu0
      %v1231 = vadd.f32 %v1091, %v1230
      %v1232 = vpop.f32.mrb[0].mxu0
      %v1233 = vpop.f32.mrb[0].mxu0
      %v1234 = vadd.f32 %v1091, %v1233
      %v1235 = vpop.f32.mrb[0].mxu0
      %1236 = vdwg.mxu0
      %v1237 = vxor.u32 %v1175, 2147483648
      %v1238 = vxor.u32 %v1178, 2147483648
      %v1239 = vxor.u32 %v1183, 2147483648
      %v1240 = vxor.u32 %v1186, 2147483648
      %v1241 = vxor.u32 %v1191, 2147483648
      %v1242 = vxor.u32 %v1194, 2147483648
      %v1243 = vxor.u32 %v1199, 2147483648
      %v1244 = vxor.u32 %v1202, 2147483648
      %v1245 = vxor.u32 %v1207, 2147483648
      %v1246 = vxor.u32 %v1210, 2147483648
      %v1247 = vxor.u32 %v1215, 2147483648
      %v1248 = vxor.u32 %v1218, 2147483648
      %v1249 = vxor.u32 %v1223, 2147483648
      %v1250 = vxor.u32 %v1226, 2147483648
      %v1251 = vxor.u32 %v1231, 2147483648
      %v1252 = vxor.u32 %v1234, 2147483648
      %v1253 = vmul.f32 %v1237, 1.442695
      %v1254 = vpow.pop %v1253
      %v1255 = vmul.f32 %v1238, 1.442695
      %v1256 = vpow.pop %v1255
      %v1257 = vmul.f32 %v1239, 1.442695
      %v1258 = vpow.pop %v1257
      %v1259 = vmul.f32 %v1240, 1.442695
      %v1260 = vpow.pop %v1259
      %v1261 = vmul.f32 %v1241, 1.442695
      %v1262 = vpow.pop %v1261
      %v1263 = vmul.f32 %v1242, 1.442695
      %v1264 = vpow.pop %v1263
      %v1265 = vmul.f32 %v1243, 1.442695
      %v1266 = vpow.pop %v1265
      %v1267 = vmul.f32 %v1244, 1.442695
      %v1268 = vpow.pop %v1267
      %v1269 = vmul.f32 %v1245, 1.442695
      %v1270 = vpow.pop %v1269
      %v1271 = vmul.f32 %v1246, 1.442695
      %v1272 = vpow.pop %v1271
      %v1273 = vmul.f32 %v1247, 1.442695
      %v1274 = vpow.pop %v1273
      %v1275 = vmul.f32 %v1248, 1.442695
      %v1276 = vpow.pop %v1275
      %v1277 = vmul.f32 %v1249, 1.442695
      %v1278 = vpow.pop %v1277
      %v1279 = vmul.f32 %v1250, 1.442695
      %v1280 = vpow.pop %v1279
      %v1281 = vmul.f32 %v1251, 1.442695
      %v1282 = vpow.pop %v1281
      %v1283 = vmul.f32 %v1252, 1.442695
      %v1284 = vpow.pop %v1283
      %v1285 = vadd.f32 %v1254, 1.0
      %v1286 = vadd.f32 %v1256, 1.0
      %v1287 = vadd.f32 %v1258, 1.0
      %v1288 = vadd.f32 %v1260, 1.0
      %v1289 = vadd.f32 %v1262, 1.0
      %v1290 = vadd.f32 %v1264, 1.0
      %v1291 = vadd.f32 %v1266, 1.0
      %v1292 = vadd.f32 %v1268, 1.0
      %v1293 = vadd.f32 %v1270, 1.0
      %v1294 = vadd.f32 %v1272, 1.0
      %v1295 = vadd.f32 %v1274, 1.0
      %v1296 = vadd.f32 %v1276, 1.0
      %v1297 = vadd.f32 %v1278, 1.0
      %v1298 = vadd.f32 %v1280, 1.0
      %v1299 = vadd.f32 %v1282, 1.0
      %v1300 = vadd.f32 %v1284, 1.0
      %v1301 = vrcp.pop %v1285
      %v1302 = vmul.f32 1.0, %v1301
      %v1303 = vrcp.pop %v1286
      %v1304 = vmul.f32 1.0, %v1303
      %v1305 = vrcp.pop %v1287
      %v1306 = vmul.f32 1.0, %v1305
      %v1307 = vrcp.pop %v1288
      %v1308 = vmul.f32 1.0, %v1307
      %v1309 = vrcp.pop %v1289
      %v1310 = vmul.f32 1.0, %v1309
      %v1311 = vrcp.pop %v1290
      %v1312 = vmul.f32 1.0, %v1311
      %v1313 = vrcp.pop %v1291
      %v1314 = vmul.f32 1.0, %v1313
      %v1315 = vrcp.pop %v1292
      %v1316 = vmul.f32 1.0, %v1315
      %v1317 = vrcp.pop %v1293
      %v1318 = vmul.f32 1.0, %v1317
      %v1319 = vrcp.pop %v1294
      %v1320 = vmul.f32 1.0, %v1319
      %v1321 = vrcp.pop %v1295
      %v1322 = vmul.f32 1.0, %v1321
      %v1323 = vrcp.pop %v1296
      %v1324 = vmul.f32 1.0, %v1323
      %v1325 = vrcp.pop %v1297
      %v1326 = vmul.f32 1.0, %v1325
      %v1327 = vrcp.pop %v1298
      %v1328 = vmul.f32 1.0, %v1327
      %v1329 = vrcp.pop %v1299
      %v1330 = vmul.f32 1.0, %v1329
      %v1331 = vrcp.pop %v1300
      %v1332 = vmul.f32 1.0, %v1331
      %v1333 = vmul.f32 %v1175, %v1302
      %v1334 = vmul.f32 %v1178, %v1304
      %v1335 = vmul.f32 %v1183, %v1306
      %v1336 = vmul.f32 %v1186, %v1308
      %v1337 = vmul.f32 %v1191, %v1310
      %v1338 = vmul.f32 %v1194, %v1312
      %v1339 = vmul.f32 %v1199, %v1314
      %v1340 = vmul.f32 %v1202, %v1316
      %v1341 = vmul.f32 %v1207, %v1318
      %v1342 = vmul.f32 %v1210, %v1320
      %v1343 = vmul.f32 %v1215, %v1322
      %v1344 = vmul.f32 %v1218, %v1324
      %v1345 = vmul.f32 %v1223, %v1326
      %v1346 = vmul.f32 %v1226, %v1328
      %v1347 = vmul.f32 %v1231, %v1330
      %v1348 = vmul.f32 %v1234, %v1332
      %v1349 = vpack.c.bf16 %v1334, %v1333
      %v1350 = vpack.c.bf16 %v1336, %v1335
      %v1351 = vpack.c.bf16 %v1338, %v1337
      %v1352 = vpack.c.bf16 %v1340, %v1339
      %v1353 = vpack.c.bf16 %v1342, %v1341
      %v1354 = vpack.c.bf16 %v1344, %v1343
      %v1355 = vpack.c.bf16 %v1346, %v1345
      %v1356 = vpack.c.bf16 %v1348, %v1347
      %v1357 = vld [vmem:[%s291] sm:$0xf]
      %v1358 = vld [vmem:[%s291 + $0x4] sm:$0xf]
      %v1359 = vld [vmem:[%s291 + $0x8] sm:$0xf]
      %v1360 = vld [vmem:[%s291 + $0xc] sm:$0xf]
      %v1361 = vld [vmem:[%s291 + $0x10] sm:$0xf]
      %v1362 = vld [vmem:[%s291 + $0x14] sm:$0xf]
      %v1363 = vld [vmem:[%s291 + $0x18] sm:$0xf]
      %v1364 = vld [vmem:[%s291 + $0x1c] sm:$0xf]
      %v1365 = vld [vmem:[%s291 + $0x20] sm:$0xf]
      %v1366 = vld [vmem:[%s291 + $0x24] sm:$0xf]
      %v1367 = vld [vmem:[%s291 + $0x28] sm:$0xf]
      %v1368 = vld [vmem:[%s291 + $0x2c] sm:$0xf]
      %v1369 = vld [vmem:[%s291 + $0x30] sm:$0xf]
      %v1370 = vld [vmem:[%s291 + $0x34] sm:$0xf]
      %v1371 = vld [vmem:[%s291 + $0x38] sm:$0xf]
      %v1372 = vld [vmem:[%s291 + $0x3c] sm:$0xf]
      %v1389 = vunpack.c.l.b16 %v1357
      %v1390 = vunpack.c.l.b16 %v1358
      %v1391 = vunpack.c.l.b16 %v1359
      %v1392 = vunpack.c.l.b16 %v1360
      %v1393 = vunpack.c.l.b16 %v1361
      %v1394 = vunpack.c.l.b16 %v1362
      %v1395 = vunpack.c.l.b16 %v1363
      %v1396 = vunpack.c.l.b16 %v1364
      %v1397 = vunpack.c.l.b16 %v1365
      %v1398 = vunpack.c.l.b16 %v1366
      %v1399 = vunpack.c.l.b16 %v1367
      %v1400 = vunpack.c.l.b16 %v1368
      %v1401 = vunpack.c.l.b16 %v1369
      %v1402 = vunpack.c.l.b16 %v1370
      %v1403 = vunpack.c.l.b16 %v1371
      %v1404 = vunpack.c.l.b16 %v1372
      %v1405 = vpack.c.b16 %v1390, %v1389
      %v1406 = vpack.c.b16 %v1392, %v1391
      %v1407 = vpack.c.b16 %v1394, %v1393
      %v1408 = vpack.c.b16 %v1396, %v1395
      %v1409 = vpack.c.b16 %v1398, %v1397
      %v1410 = vpack.c.b16 %v1400, %v1399
      %v1411 = vpack.c.b16 %v1402, %v1401
      %v1412 = vpack.c.b16 %v1404, %v1403
      %1421 = vmatprep.subr.bf16.mxu0 0
      %1422 = vmatpush1.bf16.msra.mxu0 %v1405
      %1423 = vmatprep.subr.bf16.mxu0 0
      %1424 = vmatpush1.bf16.msra.mxu0 %v1406
      %1425 = vmatprep.subr.bf16.mxu0 0
      %1426 = vmatpush1.bf16.msra.mxu0 %v1407
      %1427 = vmatprep.subr.bf16.mxu0 0
      %1428 = vmatpush1.bf16.msra.mxu0 %v1408
      %1429 = vmatprep.subr.bf16.mxu0 0
      %1430 = vmatpush1.bf16.msra.mxu0 %v1409
      %1431 = vmatprep.subr.bf16.mxu0 0
      %1432 = vmatpush1.bf16.msra.mxu0 %v1410
      %1433 = vmatprep.subr.bf16.mxu0 0
      %1434 = vmatpush1.bf16.msra.mxu0 %v1411
      %1435 = vmatprep.subr.bf16.mxu0 0
      %1436 = vmatpush1.bf16.msra.mxu0 %v1412
      %1437 = vmatprep.subr.bf16.mxu0 0
      %1438 = vmatpush1.bf16.msra.mxu0 0
      %1439 = vmatprep.subr.bf16.mxu0 0
      %1440 = vmatpush1.bf16.msra.mxu0 0
      %1441 = vmatprep.subr.bf16.mxu0 0
      %1442 = vmatpush1.bf16.msra.mxu0 0
      %1443 = vmatprep.subr.bf16.mxu0 0
      %1444 = vmatpush1.bf16.msra.mxu0 0
      %1445 = vmatprep.subr.bf16.mxu0 0
      %1446 = vmatpush1.bf16.msra.mxu0 0
      %1447 = vmatprep.subr.bf16.mxu0 0
      %1448 = vmatpush1.bf16.msra.mxu0 0
      %1449 = vmatprep.subr.bf16.mxu0 0
      %1450 = vmatpush1.bf16.msra.mxu0 0
      %1451 = vmatprep.subr.bf16.mxu0 0
      %1452 = vmatpush1.bf16.msra.mxu0 0
      %1453 = vmatprep.mubr.bf16.mxu0 0
      %1454 = vmatmul.mubr.bf16.gmra.mrb[0].mxu0 %v1349
      %v1455 = vpop.f32.mrb[0].mxu0
      %v1456 = vadd.f32 %v851, %v1455
      %v1457 = vpop.f32.mrb[0].mxu0
      %v1458 = vpop.f32.mrb[0].mxu0
      %v1459 = vadd.f32 %v852, %v1458
      %v1460 = vpop.f32.mrb[0].mxu0
      %1461 = vmatprep.mubr.bf16.mxu0 0
      %1462 = vmatmul.mubr.bf16.gmra.mrb[0].mxu0 %v1350
      %v1463 = vpop.f32.mrb[0].mxu0
      %v1464 = vadd.f32 %v853, %v1463
      %v1465 = vpop.f32.mrb[0].mxu0
      %v1466 = vpop.f32.mrb[0].mxu0
      %v1467 = vadd.f32 %v854, %v1466
      %v1468 = vpop.f32.mrb[0].mxu0
      %1469 = vmatprep.mubr.bf16.mxu0 0
      %1470 = vmatmul.mubr.bf16.gmra.mrb[0].mxu0 %v1351
      %v1471 = vpop.f32.mrb[0].mxu0
      %v1472 = vadd.f32 %v855, %v1471
      %v1473 = vpop.f32.mrb[0].mxu0
      %v1474 = vpop.f32.mrb[0].mxu0
      %v1475 = vadd.f32 %v856, %v1474
      %v1476 = vpop.f32.mrb[0].mxu0
      %1477 = vmatprep.mubr.bf16.mxu0 0
      %1478 = vmatmul.mubr.bf16.gmra.mrb[0].mxu0 %v1352
      %v1479 = vpop.f32.mrb[0].mxu0
      %v1480 = vadd.f32 %v857, %v1479
      %v1481 = vpop.f32.mrb[0].mxu0
      %v1482 = vpop.f32.mrb[0].mxu0
      %v1483 = vadd.f32 %v858, %v1482
      %v1484 = vpop.f32.mrb[0].mxu0
      %1485 = vmatprep.mubr.bf16.mxu0 0
      %1486 = vmatmul.mubr.bf16.gmra.mrb[0].mxu0 %v1353
      %v1487 = vpop.f32.mrb[0].mxu0
      %v1488 = vadd.f32 %v859, %v1487
      %v1489 = vpop.f32.mrb[0].mxu0
      %v1490 = vpop.f32.mrb[0].mxu0
      %v1491 = vadd.f32 %v860, %v1490
      %v1492 = vpop.f32.mrb[0].mxu0
      %1493 = vmatprep.mubr.bf16.mxu0 0
      %1494 = vmatmul.mubr.bf16.gmra.mrb[0].mxu0 %v1354
      %v1495 = vpop.f32.mrb[0].mxu0
      %v1496 = vadd.f32 %v861, %v1495
      %v1497 = vpop.f32.mrb[0].mxu0
      %v1498 = vpop.f32.mrb[0].mxu0
      %v1499 = vadd.f32 %v862, %v1498
      %v1500 = vpop.f32.mrb[0].mxu0
      %1501 = vmatprep.mubr.bf16.mxu0 0
      %1502 = vmatmul.mubr.bf16.gmra.mrb[0].mxu0 %v1355
      %v1503 = vpop.f32.mrb[0].mxu0
      %v1504 = vadd.f32 %v863, %v1503
      %v1505 = vpop.f32.mrb[0].mxu0
      %v1506 = vpop.f32.mrb[0].mxu0
      %v1507 = vadd.f32 %v864, %v1506
      %v1508 = vpop.f32.mrb[0].mxu0
      %1509 = vmatprep.mubr.bf16.mxu0 0
      %1510 = vmatmul.mubr.bf16.gmra.mrb[0].mxu0 %v1356
      %v1511 = vpop.f32.mrb[0].mxu0
      %v1512 = vadd.f32 %v865, %v1511
      %v1513 = vpop.f32.mrb[0].mxu0
      %v1514 = vpop.f32.mrb[0].mxu0
      %v1515 = vadd.f32 %v866, %v1514
      %v1516 = vpop.f32.mrb[0].mxu0
      %1517 = vdwg.mxu0
      %1518 = vst [vmem:[#allocation2] sm:$0xff] %v1456
      %1519 = vst [vmem:[#allocation2 + $0x8] sm:$0xff] %v1459
      %1520 = vst [vmem:[#allocation2 + $0x10] sm:$0xff] %v1464
      %1521 = vst [vmem:[#allocation2 + $0x18] sm:$0xff] %v1467
      %1522 = vst [vmem:[#allocation2 + $0x20] sm:$0xff] %v1472
      %1523 = vst [vmem:[#allocation2 + $0x28] sm:$0xff] %v1475
      %1524 = vst [vmem:[#allocation2 + $0x30] sm:$0xff] %v1480
      %1525 = vst [vmem:[#allocation2 + $0x38] sm:$0xff] %v1483
      %1526 = vst [vmem:[#allocation2 + $0x40] sm:$0xff] %v1488
      %1527 = vst [vmem:[#allocation2 + $0x48] sm:$0xff] %v1491
      %1528 = vst [vmem:[#allocation2 + $0x50] sm:$0xff] %v1496
      %1529 = vst [vmem:[#allocation2 + $0x58] sm:$0xff] %v1499
      %1530 = vst [vmem:[#allocation2 + $0x60] sm:$0xff] %v1504
      %1531 = vst [vmem:[#allocation2 + $0x68] sm:$0xff] %v1507
      %1532 = vst [vmem:[#allocation2 + $0x70] sm:$0xff] %v1512
      %1533 = vst [vmem:[#allocation2 + $0x78] sm:$0xff] %v1515
      %p1534 = scmp.eq.s32.totalorder %s19, 1
      // Predicated region
      $region119: #{smpnn_forward.1} parent=43 // pred_check
        %p1535 = pneg %p1534
      $region120: #{smpnn_forward.1} parent=43 // pred_check_branch
        %1537 = sbr.rel (%p1535) target = $region122
      $region121: #{smpnn_forward.1} parent=43 // pred_region
        %v1538 = vpack.c.bf16 %v1459, %v1456
        %v1539 = vpack.c.bf16 %v1467, %v1464
        %v1540 = vpack.c.bf16 %v1475, %v1472
        %v1541 = vpack.c.bf16 %v1483, %v1480
        %v1542 = vpack.c.bf16 %v1491, %v1488
        %v1543 = vpack.c.bf16 %v1499, %v1496
        %v1544 = vpack.c.bf16 %v1507, %v1504
        %v1545 = vpack.c.bf16 %v1515, %v1512
        %v1546 = vld [vmem:[%s6] sm:$0xf]
        %v1547 = vld [vmem:[%s6 + $0x4] sm:$0xf]
        %v1548 = vld [vmem:[%s6 + $0x8] sm:$0xf]
        %v1549 = vld [vmem:[%s6 + $0xc] sm:$0xf]
        %v1550 = vld [vmem:[%s6 + $0x10] sm:$0xf]
        %v1551 = vld [vmem:[%s6 + $0x14] sm:$0xf]
        %v1552 = vld [vmem:[%s6 + $0x18] sm:$0xf]
        %v1553 = vld [vmem:[%s6 + $0x1c] sm:$0xf]
        %v1554 = vld [vmem:[%s6 + $0x20] sm:$0xf]
        %v1555 = vld [vmem:[%s6 + $0x24] sm:$0xf]
        %v1556 = vld [vmem:[%s6 + $0x28] sm:$0xf]
        %v1557 = vld [vmem:[%s6 + $0x2c] sm:$0xf]
        %v1558 = vld [vmem:[%s6 + $0x30] sm:$0xf]
        %v1559 = vld [vmem:[%s6 + $0x34] sm:$0xf]
        %v1560 = vld [vmem:[%s6 + $0x38] sm:$0xf]
        %v1561 = vld [vmem:[%s6 + $0x3c] sm:$0xf]
        %v1562 = vld [vmem:[%s7] sm:$0x1]
        %v1564 = vlaneseq
        %v1565 = vshrl.u32 %v1564, 7
        %v1566 = vsub.s32 0, %v1565
        %v1567 = vrot.slane %v1562, %v1566
        %v1585 = vunpack.c.l.b16 %v1546
        %v1586 = vunpack.c.l.b16 %v1547
        %v1587 = vunpack.c.l.b16 %v1548
        %v1588 = vunpack.c.l.b16 %v1549
        %v1589 = vunpack.c.l.b16 %v1550
        %v1590 = vunpack.c.l.b16 %v1551
        %v1591 = vunpack.c.l.b16 %v1552
        %v1592 = vunpack.c.l.b16 %v1553
        %v1593 = vunpack.c.l.b16 %v1554
        %v1594 = vunpack.c.l.b16 %v1555
        %v1595 = vunpack.c.l.b16 %v1556
        %v1596 = vunpack.c.l.b16 %v1557
        %v1597 = vunpack.c.l.b16 %v1558
        %v1598 = vunpack.c.l.b16 %v1559
        %v1599 = vunpack.c.l.b16 %v1560
        %v1600 = vunpack.c.l.b16 %v1561
        %v1601 = vpack.c.b16 %v1586, %v1585
        %v1602 = vpack.c.b16 %v1588, %v1587
        %v1603 = vpack.c.b16 %v1590, %v1589
        %v1604 = vpack.c.b16 %v1592, %v1591
        %v1605 = vpack.c.b16 %v1594, %v1593
        %v1606 = vpack.c.b16 %v1596, %v1595
        %v1607 = vpack.c.b16 %v1598, %v1597
        %v1608 = vpack.c.b16 %v1600, %v1599
        %1617 = vmatprep.subr.bf16.mxu0 0
        %1618 = vmatpush1.bf16.msra.mxu0 %v1601
        %1619 = vmatprep.subr.bf16.mxu0 0
        %1620 = vmatpush1.bf16.msra.mxu0 %v1602
        %1621 = vmatprep.subr.bf16.mxu0 0
        %1622 = vmatpush1.bf16.msra.mxu0 %v1603
        %1623 = vmatprep.subr.bf16.mxu0 0
        %1624 = vmatpush1.bf16.msra.mxu0 %v1604
        %1625 = vmatprep.subr.bf16.mxu0 0
        %1626 = vmatpush1.bf16.msra.mxu0 %v1605
        %1627 = vmatprep.subr.bf16.mxu0 0
        %1628 = vmatpush1.bf16.msra.mxu0 %v1606
        %1629 = vmatprep.subr.bf16.mxu0 0
        %1630 = vmatpush1.bf16.msra.mxu0 %v1607
        %1631 = vmatprep.subr.bf16.mxu0 0
        %1632 = vmatpush1.bf16.msra.mxu0 %v1608
        %1633 = vmatprep.subr.bf16.mxu0 0
        %1634 = vmatpush1.bf16.msra.mxu0 0
        %1635 = vmatprep.subr.bf16.mxu0 0
        %1636 = vmatpush1.bf16.msra.mxu0 0
        %1637 = vmatprep.subr.bf16.mxu0 0
        %1638 = vmatpush1.bf16.msra.mxu0 0
        %1639 = vmatprep.subr.bf16.mxu0 0
        %1640 = vmatpush1.bf16.msra.mxu0 0
        %1641 = vmatprep.subr.bf16.mxu0 0
        %1642 = vmatpush1.bf16.msra.mxu0 0
        %1643 = vmatprep.subr.bf16.mxu0 0
        %1644 = vmatpush1.bf16.msra.mxu0 0
        %1645 = vmatprep.subr.bf16.mxu0 0
        %1646 = vmatpush1.bf16.msra.mxu0 0
        %1647 = vmatprep.subr.bf16.mxu0 0
        %1648 = vmatpush1.bf16.msra.mxu0 0
        %1649 = vmatprep.mubr.bf16.mxu0 0
        %1650 = vmatmul.mubr.bf16.gmra.mrb[0].mxu0 %v1538
        %v1651 = vpop.f32.mrb[0].mxu0
        %v1652 = vadd.f32 %v1567, %v1651
        %v1653 = vpop.f32.mrb[0].mxu0
        %v1654 = vpop.f32.mrb[0].mxu0
        %v1655 = vadd.f32 %v1567, %v1654
        %v1656 = vpop.f32.mrb[0].mxu0
        %1657 = vmatprep.mubr.bf16.mxu0 0
        %1658 = vmatmul.mubr.bf16.gmra.mrb[0].mxu0 %v1539
        %v1659 = vpop.f32.mrb[0].mxu0
        %v1660 = vadd.f32 %v1567, %v1659
        %v1661 = vpop.f32.mrb[0].mxu0
        %v1662 = vpop.f32.mrb[0].mxu0
        %v1663 = vadd.f32 %v1567, %v1662
        %v1664 = vpop.f32.mrb[0].mxu0
        %1665 = vmatprep.mubr.bf16.mxu0 0
        %1666 = vmatmul.mubr.bf16.gmra.mrb[0].mxu0 %v1540
        %v1667 = vpop.f32.mrb[0].mxu0
        %v1668 = vadd.f32 %v1567, %v1667
        %v1669 = vpop.f32.mrb[0].mxu0
        %v1670 = vpop.f32.mrb[0].mxu0
        %v1671 = vadd.f32 %v1567, %v1670
        %v1672 = vpop.f32.mrb[0].mxu0
        %1673 = vmatprep.mubr.bf16.mxu0 0
        %1674 = vmatmul.mubr.bf16.gmra.mrb[0].mxu0 %v1541
        %v1675 = vpop.f32.mrb[0].mxu0
        %v1676 = vadd.f32 %v1567, %v1675
        %v1677 = vpop.f32.mrb[0].mxu0
        %v1678 = vpop.f32.mrb[0].mxu0
        %v1679 = vadd.f32 %v1567, %v1678
        %v1680 = vpop.f32.mrb[0].mxu0
        %1681 = vmatprep.mubr.bf16.mxu0 0
        %1682 = vmatmul.mubr.bf16.gmra.mrb[0].mxu0 %v1542
        %v1683 = vpop.f32.mrb[0].mxu0
        %v1684 = vadd.f32 %v1567, %v1683
        %v1685 = vpop.f32.mrb[0].mxu0
        %v1686 = vpop.f32.mrb[0].mxu0
        %v1687 = vadd.f32 %v1567, %v1686
        %v1688 = vpop.f32.mrb[0].mxu0
        %1689 = vmatprep.mubr.bf16.mxu0 0
        %1690 = vmatmul.mubr.bf16.gmra.mrb[0].mxu0 %v1543
        %v1691 = vpop.f32.mrb[0].mxu0
        %v1692 = vadd.f32 %v1567, %v1691
        %v1693 = vpop.f32.mrb[0].mxu0
        %v1694 = vpop.f32.mrb[0].mxu0
        %v1695 = vadd.f32 %v1567, %v1694
        %v1696 = vpop.f32.mrb[0].mxu0
        %1697 = vmatprep.mubr.bf16.mxu0 0
        %1698 = vmatmul.mubr.bf16.gmra.mrb[0].mxu0 %v1544
        %v1699 = vpop.f32.mrb[0].mxu0
        %v1700 = vadd.f32 %v1567, %v1699
        %v1701 = vpop.f32.mrb[0].mxu0
        %v1702 = vpop.f32.mrb[0].mxu0
        %v1703 = vadd.f32 %v1567, %v1702
        %v1704 = vpop.f32.mrb[0].mxu0
        %1705 = vmatprep.mubr.bf16.mxu0 0
        %1706 = vmatmul.mubr.bf16.gmra.mrb[0].mxu0 %v1545
        %v1707 = vpop.f32.mrb[0].mxu0
        %v1708 = vadd.f32 %v1567, %v1707
        %v1709 = vpop.f32.mrb[0].mxu0
        %v1710 = vpop.f32.mrb[0].mxu0
        %v1711 = vadd.f32 %v1567, %v1710
        %v1712 = vpop.f32.mrb[0].mxu0
        %1713 = vdwg.mxu0
        %1714 = vst [vmem:[%s8] sm:$0xff] %v1652
        %1715 = vst [vmem:[%s8 + $0x8] sm:$0xff] %v1655
        %1716 = vst [vmem:[%s8 + $0x10] sm:$0xff] %v1660
        %1717 = vst [vmem:[%s8 + $0x18] sm:$0xff] %v1663
        %1718 = vst [vmem:[%s8 + $0x20] sm:$0xff] %v1668
        %1719 = vst [vmem:[%s8 + $0x28] sm:$0xff] %v1671
        %1720 = vst [vmem:[%s8 + $0x30] sm:$0xff] %v1676
        %1721 = vst [vmem:[%s8 + $0x38] sm:$0xff] %v1679
        %1722 = vst [vmem:[%s8 + $0x40] sm:$0xff] %v1684
        %1723 = vst [vmem:[%s8 + $0x48] sm:$0xff] %v1687
        %1724 = vst [vmem:[%s8 + $0x50] sm:$0xff] %v1692
        %1725 = vst [vmem:[%s8 + $0x58] sm:$0xff] %v1695
        %1726 = vst [vmem:[%s8 + $0x60] sm:$0xff] %v1700
        %1727 = vst [vmem:[%s8 + $0x68] sm:$0xff] %v1703
        %1728 = vst [vmem:[%s8 + $0x70] sm:$0xff] %v1708
        %1729 = vst [vmem:[%s8 + $0x78] sm:$0xff] %v1711
      $region122: #{smpnn_forward.1} parent=43 // pred_fallthru
        _
      // Predicated region
      $region123: #{smpnn_forward.1} parent=43 // pred_check
        %p1730 = pneg %p178
      $region124: #{smpnn_forward.1} parent=43 // pred_check_branch
        %1732 = sbr.rel (%p1730) target = $region126
      $region125: #{smpnn_forward.1} parent=43 // pred_region
        _
      $region126: #{smpnn_forward.1} parent=43 // pred_fallthru
        _
      // Predicated region
      $region127: #{smpnn_forward.1} parent=43 // pred_check
        %p1733 = pneg %p178
      $region128: #{smpnn_forward.1} parent=43 // pred_check_branch
        %1735 = sbr.rel (%p1733) target = $region130
      $region129: #{smpnn_forward.1} parent=43 // pred_region
        _
      $region130: #{smpnn_forward.1} parent=43 // pred_fallthru
        _
    $region44: #{smpnn_forward.1} parent=5 // pred_fallthru
      _
    %p1736 = scmp.le.s32.totalorder 2, %s14
    // Predicated region
    $region131: #{smpnn_forward.1} parent=5 // pred_check
      %p1737 = pneg %p1736
    $region132: #{smpnn_forward.1} parent=5 // pred_check_branch
      %1739 = sbr.rel (%p1737) target = $region134
    $region133: #{smpnn_forward.1} parent=5 // pred_region
      %s1740 = ssub.s32 %s14, 2
    $region134: #{smpnn_forward.1} parent=5 // pred_fallthru
      _
  $region6: #{smpnn_forward.1} parent=0 // loop_footer
    %s18 = sadd.s32 1, %s14
  $region7: #{smpnn_forward.1} parent=0 // loop_footer_branch
    %13 = sbr.rel target = $region3
  $region8: #{smpnn_forward.1} parent=0 // loop_exit
    _

</llo_original>
